<compile_context>
chip_gen: v7x
topology: tpu7x:2x2x1
jax: 0.10.0
libtpu: 0.0.40
codegen_flags: <defaults>
</compile_context>

<pallas_src>
import jax
import jax.numpy as jnp
from jax.experimental import pallas as pl
from jax.experimental.pallas import tpu as pltpu


_SQRT_HALF = 0.7071067811865476


def _gelu_exact(x):
    # PyTorch nn.GELU() default (approximate='none'): 0.5*x*(1+erf(x/sqrt(2)))
    return 0.5 * x * (1.0 + jax.lax.erf(x * _SQRT_HALF))


def _round_up(n: int, m: int) -> int:
    return (n + m - 1) // m * m


# ----------------------------------------------------------------------------- kernel
def make_mlp_kernel(num_linear: int, seg_true, seg_off_pad, out_dim: int):
    """Ref layout: (x, ctx, w0_pad, b_packed, w1, ..., w_{L-1}, out)."""

    def kernel(*refs):
        x_ref, ctx_ref, w0_ref, b_ref = refs[:4]
        tail_w_refs = refs[4:4 + num_linear - 1]
        out_ref = refs[-1]

        n0 = w0_ref.shape[1]
        # --- Layer 0: fused concat via two row-slice matmuls; bias seeds the acc.
        # NOTE: seg_off_pad entries are multiples of 8 -> sublane-aligned slices.
        h = b_ref[0][:, :n0].astype(jnp.float32)          # (1, n0), broadcasts over rows
        for r, o, s in zip((x_ref, ctx_ref), seg_off_pad, seg_true):
            h = h + jnp.dot(r[...], w0_ref[o:o + s, :],
                            preferred_element_type=jnp.float32)
        h = _gelu_exact(h)

        # --- Tail layers (GELU after every linear except the last).
        # Fully unrolled: only a handful of tiny layers here.
        # TODO(synk): for deep/wide configs, stack tail weights into one
        # (L-1, Kp, Np) input and iterate with lax.fori_loop to bound live ranges.
        for li in range(1, num_linear):
            w_ref = tail_w_refs[li - 1]
            kp, np_ = w_ref.shape
            # Slice h back to the (8-aligned) true K of this layer: padded columns
            # of h are exactly zero, and padded K rows of the weight are zero too.
            h = jnp.dot(h[:, :kp].astype(w_ref.dtype), w_ref[...],
                        preferred_element_type=jnp.float32)
            h = h + b_ref[li][:, :np_].astype(jnp.float32)
            if li < num_linear - 1:
                h = _gelu_exact(h)

        # True-width store: avoids writing 8x the needed output bytes + a wrapper
        # slice pass (tradeoff: masked vst instead of a lane-dense one).
        out_ref[...] = h[:, :out_dim].astype(out_ref.dtype)

    return kernel


# ----------------------------------------------------------------------------- params
def prepare_padded_params(weights, biases, input_size, emb_size,
                          lane: int = 128, sub: int = 8, param_dtype=None):
    """Per-layer padding (done once, outside the kernel call path):
       * w0: rows split into the x segment and the (c1|c2|t) segment, each placed
         at a sublane(8)-aligned row offset; columns padded to a multiple of 128.
       * tail weights: K padded to a multiple of 8 (the TRUE previous width, not
         the lane-padded one), N padded to a multiple of 128.
       * biases packed into one (L, 1, Nmax) array -> a single small DMA.
       Zero padding is numerically exact: gelu(0)=0 and zero rows multiply zeros."""
    param_dtype = param_dtype or weights[0].dtype
    num_linear = len(weights)

    seg_true = (int(input_size), int(3 * emb_size))
    seg_pad = tuple(_round_up(s, sub) for s in seg_true)
    seg_off_pad = (0, seg_pad[0])
    k0_pad = sum(seg_pad)

    n_pads = [_round_up(w.shape[1], lane) for w in weights]
    n_max = max(n_pads)

    w0 = weights[0].astype(param_dtype)
    w0_pad = jnp.zeros((k0_pad, n_pads[0]), param_dtype)
    w0_pad = w0_pad.at[0:seg_true[0], : w0.shape[1]].set(w0[0:seg_true[0]])
    w0_pad = w0_pad.at[seg_off_pad[1]:seg_off_pad[1] + seg_true[1], : w0.shape[1]].set(
        w0[seg_true[0]:])

    tail = []
    for w, np_ in zip(weights[1:], n_pads[1:]):
        kp = _round_up(w.shape[0], sub)
        wp = jnp.zeros((kp, np_), param_dtype)
        wp = wp.at[: w.shape[0], : w.shape[1]].set(w.astype(param_dtype))
        tail.append(wp)

    b_packed = jnp.zeros((num_linear, 1, n_max), jnp.float32)
    for i, b in enumerate(biases):
        b_packed = b_packed.at[i, 0, : b.shape[0]].set(b.astype(jnp.float32))

    return dict(w0_pad=w0_pad, b_packed=b_packed, tail=tuple(tail),
                seg_true=seg_true, seg_off_pad=seg_off_pad)


# ----------------------------------------------------------------------------- wrapper
def _choose_batch_tile(B: int) -> int:
    """Large tiles amortize the ~0.35us per-grid-step overhead; keep >=2 steps for
    moderate/large B so both v7x TensorCores get work. Tile is a multiple of 8
    (or equals the full batch)."""
    if B <= 64:
        return B                                   # single step; block dim == array dim
    return min(512, _round_up(pl.cdiv(B, 2), 8))   # TODO(synk): sweep 256..1024


def _resident_spec(shape, single_buffer: bool):
    idx = lambda i: (0,) * len(shape)
    if single_buffer and hasattr(pl, "Buffered"):
        # Constant index_map across the grid -> a second pipeline buffer is pure
        # VMEM waste; keep resident params single-buffered.
        return pl.BlockSpec(shape, idx, pipeline_mode=pl.Buffered(1))
    return pl.BlockSpec(shape, idx)


def mlp_pallas(x, c1, c2, t, params, out_dim):
    """Fused MLP forward: concat, all matmuls, bias adds and GELUs run in one
    Pallas kernel; the output is emitted at its true width."""
    B = x.shape[0]
    # Tiny (B, 3*emb) concat in the wrapper -> layer 0 is 2 matmuls instead of 4.
    ctx = jnp.concatenate((c1, c2, t), axis=-1)

    w0_pad = params["w0_pad"]
    b_packed = params["b_packed"]
    tail = params["tail"]
    seg_true = params["seg_true"]
    seg_off_pad = params["seg_off_pad"]
    num_linear = 1 + len(tail)
    assert sum(seg_true) == x.shape[1] + ctx.shape[1]

    TB = _choose_batch_tile(B)
    grid = (pl.cdiv(B, TB),)

    def batch_spec(f):
        return pl.BlockSpec((TB, f), lambda i: (i, 0))

    # Advisory cost estimate (true FLOP/byte counts) so XLA schedules neighbours well.
    flops = 2 * B * (sum(seg_true) * w0_pad.shape[1]
                     + sum(w.shape[0] * w.shape[1] for w in tail))
    transcendentals = B * w0_pad.shape[1] * (num_linear - 1)
    param_bytes = (w0_pad.size * w0_pad.dtype.itemsize
                   + b_packed.size * b_packed.dtype.itemsize
                   + sum(w.size * w.dtype.itemsize for w in tail))
    bytes_accessed = (param_bytes
                      + B * (x.shape[1] + ctx.shape[1]) * x.dtype.itemsize
                      + B * out_dim * x.dtype.itemsize)

    # VMEM budget: single-buffered resident params + double-buffered activations
    # + in-flight intermediates; generous floor, capped below v7x physical (64 MiB).
    act_bytes = 2 * TB * (x.shape[1] + ctx.shape[1] + out_dim) * 4
    work_bytes = 4 * TB * max(w0_pad.shape[1], max(w.shape[1] for w in tail)) * 4
    vmem_limit = int(min(64 << 20, max(16 << 20, 2 * (param_bytes + act_bytes + work_bytes))))

    def run(single_buffer_residents: bool):
        in_specs = [batch_spec(x.shape[1]), batch_spec(ctx.shape[1]),
                    _resident_spec(w0_pad.shape, single_buffer_residents),
                    _resident_spec(b_packed.shape, single_buffer_residents)]
        in_specs.extend(_resident_spec(w.shape, single_buffer_residents) for w in tail)

        return pl.pallas_call(
            make_mlp_kernel(num_linear, seg_true, seg_off_pad, out_dim),
            out_shape=jax.ShapeDtypeStruct((B, out_dim), x.dtype),
            grid=grid,
            in_specs=in_specs,
            out_specs=batch_spec(out_dim),
            compiler_params=pltpu.CompilerParams(
                dimension_semantics=("parallel",),
                vmem_limit_bytes=vmem_limit,
            ),
            cost_estimate=pl.CostEstimate(flops=flops,
                                          transcendentals=transcendentals,
                                          bytes_accessed=bytes_accessed),
        )(x, ctx, w0_pad, b_packed, *tail)

    try:
        return run(True)
    except Exception:
        # Fallback for JAX versions where pallas_call does not honor
        # pipeline_mode on BlockSpecs: identical semantics, double-buffered params.
        return run(False)


# ----------------------------------------------------------------------------- reference
def mlp_reference(x, c1, c2, t, weights, biases):
    h = jnp.concatenate((x, c1, c2, t), axis=-1).astype(jnp.float32)
    for i, (w, b) in enumerate(zip(weights, biases)):
        h = h @ w.astype(jnp.float32) + b.astype(jnp.float32)
        if i < len(weights) - 1:
            h = _gelu_exact(h)
    return h.astype(x.dtype)


def init_mlp_params(key, hidden_layers, input_size, emb_size, hidden_size):
    concat_size = input_size + 3 * emb_size
    dims = [concat_size, hidden_size]
    for _ in range(hidden_layers):
        dims.append(hidden_size)
    dims.append(input_size)
    weights, biases = [], []
    for i in range(len(dims) - 1):
        key, kw, kb = jax.random.split(key, 3)
        bound = 1.0 / jnp.sqrt(dims[i])
        weights.append(
            jax.random.uniform(kw, (dims[i], dims[i + 1]), jnp.float32, -bound, bound))
        biases.append(
            jax.random.uniform(kb, (dims[i + 1],), jnp.float32, -bound, bound))
    return weights, biases


if __name__ == "__main__":
    hidden_layers = 2
    input_size = 16
    emb_size = 8
    hidden_size = 32
    batch = 4

    key = jax.random.PRNGKey(0)
    kx, kc1, kc2, kt, kp = jax.random.split(key, 5)
    x = jax.random.normal(kx, (batch, input_size), jnp.float32)
    c1 = jax.random.normal(kc1, (batch, emb_size), jnp.float32)
    c2 = jax.random.normal(kc2, (batch, emb_size), jnp.float32)
    t = jax.random.normal(kt, (batch, emb_size), jnp.float32)

    weights, biases = init_mlp_params(kp, hidden_layers, input_size, emb_size, hidden_size)
    params = prepare_padded_params(weights, biases, input_size, emb_size)

    out = mlp_pallas(x, c1, c2, t, params, out_dim=input_size)
    jax.block_until_ready(out)

    ref = mlp_reference(x, c1, c2, t, weights, biases)
    assert out.shape == (batch, input_size)
    # Tolerance covers f32 accumulation-order differences from the split first matmul.
    assert jnp.allclose(out, ref, atol=1e-4, rtol=1e-4), "mismatch vs reference"

    print("KERNEL_OK")
</pallas_src>

<mosaic_0001>
module attributes {stable_mosaic.version = 11 : i64} {
  func.func @kernel(%arg0: i32, %arg1: memref<4x16xf32, #tpu.memory_space<vmem>>, %arg2: memref<4x24xf32, #tpu.memory_space<vmem>>, %arg3: memref<40x128xf32, #tpu.memory_space<vmem>>, %arg4: memref<4x1x128xf32, #tpu.memory_space<vmem>>, %arg5: memref<32x128xf32, #tpu.memory_space<vmem>>, %arg6: memref<32x128xf32, #tpu.memory_space<vmem>>, %arg7: memref<32x128xf32, #tpu.memory_space<vmem>>, %arg8: memref<4x16xf32, #tpu.memory_space<vmem>>) attributes {dimension_semantics = [#tpu.dimension_semantics<parallel>], iteration_bounds = array<i64: 1>, scalar_prefetch = 0 : i64, scratch_operands = 0 : i64, tpu.core_type = #tpu.core_type<tc>, window_params = [{transform_indices = @transform_0, window_bounds = array<i64: 4, 16>}, {transform_indices = @transform_1, window_bounds = array<i64: 4, 24>}, {pipeline_mode = #tpu.pipeline_mode<synchronous>, transform_indices = @transform_2, window_bounds = array<i64: 40, 128>}, {pipeline_mode = #tpu.pipeline_mode<synchronous>, transform_indices = @transform_3, window_bounds = array<i64: 4, 1, 128>}, {pipeline_mode = #tpu.pipeline_mode<synchronous>, transform_indices = @transform_4, window_bounds = array<i64: 32, 128>}, {pipeline_mode = #tpu.pipeline_mode<synchronous>, transform_indices = @transform_5, window_bounds = array<i64: 32, 128>}, {pipeline_mode = #tpu.pipeline_mode<synchronous>, transform_indices = @transform_6, window_bounds = array<i64: 32, 128>}, {transform_indices = @transform_7, window_bounds = array<i64: 4, 16>}]} {
    %c0 = arith.constant 0 : index
    %c0_0 = arith.constant 0 : index
    %c0_1 = arith.constant 0 : index
    %0 = vector.load %arg4[%c0, %c0_0, %c0_1] : memref<4x1x128xf32, #tpu.memory_space<vmem>>, vector<1x1x128xf32>
    %1 = vector.shape_cast %0 : vector<1x1x128xf32> to vector<1x128xf32>
    %c0_2 = arith.constant 0 : index
    %c0_3 = arith.constant 0 : index
    %2 = vector.load %arg1[%c0_2, %c0_3] : memref<4x16xf32, #tpu.memory_space<vmem>>, vector<4x16xf32>
    %c0_4 = arith.constant 0 : index
    %c0_5 = arith.constant 0 : index
    %3 = vector.load %arg3[%c0_4, %c0_5] : memref<40x128xf32, #tpu.memory_space<vmem>>, vector<16x128xf32>
    %cst = arith.constant dense<0.000000e+00> : vector<4x128xf32>
    %4 = tpu.matmul %2, %3, %cst {dimension_numbers = #tpu.dot_dimension_numbers<[1], [0], [0], [1], [0, 0, 1, 1], [], []>} : vector<4x16xf32>, vector<16x128xf32>, vector<4x128xf32> -> vector<4x128xf32>
    %5 = vector.broadcast %1 : vector<1x128xf32> to vector<4x128xf32>
    %6 = arith.addf %5, %4 : vector<4x128xf32>
    %c0_6 = arith.constant 0 : index
    %c0_7 = arith.constant 0 : index
    %7 = vector.load %arg2[%c0_6, %c0_7] : memref<4x24xf32, #tpu.memory_space<vmem>>, vector<4x24xf32>
    %c16 = arith.constant 16 : index
    %c0_8 = arith.constant 0 : index
    %8 = vector.load %arg3[%c16, %c0_8] : memref<40x128xf32, #tpu.memory_space<vmem>>, vector<24x128xf32>
    %cst_9 = arith.constant dense<0.000000e+00> : vector<4x128xf32>
    %9 = tpu.matmul %7, %8, %cst_9 {dimension_numbers = #tpu.dot_dimension_numbers<[1], [0], [0], [1], [0, 0, 1, 1], [], []>} : vector<4x24xf32>, vector<24x128xf32>, vector<4x128xf32> -> vector<4x128xf32>
    %10 = arith.addf %6, %9 : vector<4x128xf32>
    %cst_10 = arith.constant 5.000000e-01 : f32
    %11 = vector.broadcast %cst_10 : f32 to vector<4x128xf32>
    %12 = arith.mulf %11, %10 : vector<4x128xf32>
    %cst_11 = arith.constant 0.707106769 : f32
    %13 = vector.broadcast %cst_11 : f32 to vector<4x128xf32>
    %14 = arith.mulf %10, %13 : vector<4x128xf32>
    %15 = math.erf %14 : vector<4x128xf32>
    %cst_12 = arith.constant 1.000000e+00 : f32
    %16 = vector.broadcast %cst_12 : f32 to vector<4x128xf32>
    %17 = arith.addf %16, %15 : vector<4x128xf32>
    %18 = arith.mulf %12, %17 : vector<4x128xf32>
    %19 = vector.extract_strided_slice %18 {offsets = [0, 0], sizes = [4, 32], strides = [1, 1]} : vector<4x128xf32> to vector<4x32xf32>
    %c0_13 = arith.constant 0 : index
    %c0_14 = arith.constant 0 : index
    %20 = vector.load %arg5[%c0_13, %c0_14] : memref<32x128xf32, #tpu.memory_space<vmem>>, vector<32x128xf32>
    %cst_15 = arith.constant dense<0.000000e+00> : vector<4x128xf32>
    %21 = tpu.matmul %19, %20, %cst_15 {dimension_numbers = #tpu.dot_dimension_numbers<[1], [0], [0], [1], [0, 0, 1, 1], [], []>} : vector<4x32xf32>, vector<32x128xf32>, vector<4x128xf32> -> vector<4x128xf32>
    %c1 = arith.constant 1 : index
    %c0_16 = arith.constant 0 : index
    %c0_17 = arith.constant 0 : index
    %22 = vector.load %arg4[%c1, %c0_16, %c0_17] : memref<4x1x128xf32, #tpu.memory_space<vmem>>, vector<1x1x128xf32>
    %23 = vector.shape_cast %22 : vector<1x1x128xf32> to vector<1x128xf32>
    %24 = vector.broadcast %23 : vector<1x128xf32> to vector<4x128xf32>
    %25 = arith.addf %21, %24 : vector<4x128xf32>
    %cst_18 = arith.constant 5.000000e-01 : f32
    %26 = vector.broadcast %cst_18 : f32 to vector<4x128xf32>
    %27 = arith.mulf %26, %25 : vector<4x128xf32>
    %cst_19 = arith.constant 0.707106769 : f32
    %28 = vector.broadcast %cst_19 : f32 to vector<4x128xf32>
    %29 = arith.mulf %25, %28 : vector<4x128xf32>
    %30 = math.erf %29 : vector<4x128xf32>
    %cst_20 = arith.constant 1.000000e+00 : f32
    %31 = vector.broadcast %cst_20 : f32 to vector<4x128xf32>
    %32 = arith.addf %31, %30 : vector<4x128xf32>
    %33 = arith.mulf %27, %32 : vector<4x128xf32>
    %34 = vector.extract_strided_slice %33 {offsets = [0, 0], sizes = [4, 32], strides = [1, 1]} : vector<4x128xf32> to vector<4x32xf32>
    %c0_21 = arith.constant 0 : index
    %c0_22 = arith.constant 0 : index
    %35 = vector.load %arg6[%c0_21, %c0_22] : memref<32x128xf32, #tpu.memory_space<vmem>>, vector<32x128xf32>
    %cst_23 = arith.constant dense<0.000000e+00> : vector<4x128xf32>
    %36 = tpu.matmul %34, %35, %cst_23 {dimension_numbers = #tpu.dot_dimension_numbers<[1], [0], [0], [1], [0, 0, 1, 1], [], []>} : vector<4x32xf32>, vector<32x128xf32>, vector<4x128xf32> -> vector<4x128xf32>
    %c2 = arith.constant 2 : index
    %c0_24 = arith.constant 0 : index
    %c0_25 = arith.constant 0 : index
    %37 = vector.load %arg4[%c2, %c0_24, %c0_25] : memref<4x1x128xf32, #tpu.memory_space<vmem>>, vector<1x1x128xf32>
    %38 = vector.shape_cast %37 : vector<1x1x128xf32> to vector<1x128xf32>
    %39 = vector.broadcast %38 : vector<1x128xf32> to vector<4x128xf32>
    %40 = arith.addf %36, %39 : vector<4x128xf32>
    %cst_26 = arith.constant 5.000000e-01 : f32
    %41 = vector.broadcast %cst_26 : f32 to vector<4x128xf32>
    %42 = arith.mulf %41, %40 : vector<4x128xf32>
    %cst_27 = arith.constant 0.707106769 : f32
    %43 = vector.broadcast %cst_27 : f32 to vector<4x128xf32>
    %44 = arith.mulf %40, %43 : vector<4x128xf32>
    %45 = math.erf %44 : vector<4x128xf32>
    %cst_28 = arith.constant 1.000000e+00 : f32
    %46 = vector.broadcast %cst_28 : f32 to vector<4x128xf32>
    %47 = arith.addf %46, %45 : vector<4x128xf32>
    %48 = arith.mulf %42, %47 : vector<4x128xf32>
    %49 = vector.extract_strided_slice %48 {offsets = [0, 0], sizes = [4, 32], strides = [1, 1]} : vector<4x128xf32> to vector<4x32xf32>
    %c0_29 = arith.constant 0 : index
    %c0_30 = arith.constant 0 : index
    %50 = vector.load %arg7[%c0_29, %c0_30] : memref<32x128xf32, #tpu.memory_space<vmem>>, vector<32x128xf32>
    %cst_31 = arith.constant dense<0.000000e+00> : vector<4x128xf32>
    %51 = tpu.matmul %49, %50, %cst_31 {dimension_numbers = #tpu.dot_dimension_numbers<[1], [0], [0], [1], [0, 0, 1, 1], [], []>} : vector<4x32xf32>, vector<32x128xf32>, vector<4x128xf32> -> vector<4x128xf32>
    %c3 = arith.constant 3 : index
    %c0_32 = arith.constant 0 : index
    %c0_33 = arith.constant 0 : index
    %52 = vector.load %arg4[%c3, %c0_32, %c0_33] : memref<4x1x128xf32, #tpu.memory_space<vmem>>, vector<1x1x128xf32>
    %53 = vector.shape_cast %52 : vector<1x1x128xf32> to vector<1x128xf32>
    %54 = vector.broadcast %53 : vector<1x128xf32> to vector<4x128xf32>
    %55 = arith.addf %51, %54 : vector<4x128xf32>
    %56 = vector.extract_strided_slice %55 {offsets = [0, 0], sizes = [4, 16], strides = [1, 1]} : vector<4x128xf32> to vector<4x16xf32>
    %c0_34 = arith.constant 0 : index
    %c0_35 = arith.constant 0 : index
    %57 = vector.load %arg8[%c0_34, %c0_35] : memref<4x16xf32, #tpu.memory_space<vmem>>, vector<4x16xf32>
    tpu.vector_store %arg8[%c0_34, %c0_35], %56 {strides = array<i32>} : memref<4x16xf32, #tpu.memory_space<vmem>>, vector<4x16xf32>,
    return
  }
  func.func @transform_0(%arg0: i32) -> (i32, i32) {
    %c0_i32 = arith.constant 0 : i32
    %c0_i32_0 = arith.constant 0 : i32
    return %arg0, %c0_i32 : i32, i32
  }
  func.func @transform_1(%arg0: i32) -> (i32, i32) {
    %c0_i32 = arith.constant 0 : i32
    %c0_i32_0 = arith.constant 0 : i32
    return %arg0, %c0_i32 : i32, i32
  }
  func.func @transform_2(%arg0: i32) -> (i32, i32) {
    %c0_i32 = arith.constant 0 : i32
    %c0_i32_0 = arith.constant 0 : i32
    %c0_i32_1 = arith.constant 0 : i32
    return %c0_i32, %c0_i32_0 : i32, i32
  }
  func.func @transform_3(%arg0: i32) -> (i32, i32, i32) {
    %c0_i32 = arith.constant 0 : i32
    %c0_i32_0 = arith.constant 0 : i32
    %c0_i32_1 = arith.constant 0 : i32
    %c0_i32_2 = arith.constant 0 : i32
    return %c0_i32, %c0_i32_0, %c0_i32_1 : i32, i32, i32
  }
  func.func @transform_4(%arg0: i32) -> (i32, i32) {
    %c0_i32 = arith.constant 0 : i32
    %c0_i32_0 = arith.constant 0 : i32
    %c0_i32_1 = arith.constant 0 : i32
    return %c0_i32, %c0_i32_0 : i32, i32
  }
  func.func @transform_5(%arg0: i32) -> (i32, i32) {
    %c0_i32 = arith.constant 0 : i32
    %c0_i32_0 = arith.constant 0 : i32
    %c0_i32_1 = arith.constant 0 : i32
    return %c0_i32, %c0_i32_0 : i32, i32
  }
  func.func @transform_6(%arg0: i32) -> (i32, i32) {
    %c0_i32 = arith.constant 0 : i32
    %c0_i32_0 = arith.constant 0 : i32
    %c0_i32_1 = arith.constant 0 : i32
    return %c0_i32, %c0_i32_0 : i32, i32
  }
  func.func @transform_7(%arg0: i32) -> (i32, i32) {
    %c0_i32 = arith.constant 0 : i32
    %c0_i32_0 = arith.constant 0 : i32
    return %arg0, %c0_i32 : i32, i32
  }
}

module attributes {stable_mosaic.version = 11 : i64} {
  func.func @kernel(%arg0: i32, %arg1: memref<4x16xf32, #tpu.memory_space<vmem>>, %arg2: memref<4x24xf32, #tpu.memory_space<vmem>>, %arg3: memref<40x128xf32, #tpu.memory_space<vmem>>, %arg4: memref<4x1x128xf32, #tpu.memory_space<vmem>>, %arg5: memref<32x128xf32, #tpu.memory_space<vmem>>, %arg6: memref<32x128xf32, #tpu.memory_space<vmem>>, %arg7: memref<32x128xf32, #tpu.memory_space<vmem>>, %arg8: memref<4x16xf32, #tpu.memory_space<vmem>>) attributes {dimension_semantics = [#tpu.dimension_semantics<parallel>], iteration_bounds = array<i64: 1>, scalar_prefetch = 0 : i64, scratch_operands = 0 : i64, tpu.core_type = #tpu.core_type<tc>, window_params = [{transform_indices = @transform_0, window_bounds = array<i64: 4, 16>}, {transform_indices = @transform_1, window_bounds = array<i64: 4, 24>}, {pipeline_mode = #tpu.pipeline_mode<synchronous>, transform_indices = @transform_2, window_bounds = array<i64: 40, 128>}, {pipeline_mode = #tpu.pipeline_mode<synchronous>, transform_indices = @transform_3, window_bounds = array<i64: 4, 1, 128>}, {pipeline_mode = #tpu.pipeline_mode<synchronous>, transform_indices = @transform_4, window_bounds = array<i64: 32, 128>}, {pipeline_mode = #tpu.pipeline_mode<synchronous>, transform_indices = @transform_5, window_bounds = array<i64: 32, 128>}, {pipeline_mode = #tpu.pipeline_mode<synchronous>, transform_indices = @transform_6, window_bounds = array<i64: 32, 128>}, {transform_indices = @transform_7, window_bounds = array<i64: 4, 16>}]} {
    %c0 = arith.constant 0 : index
    %c0_0 = arith.constant 0 : index
    %c0_1 = arith.constant 0 : index
    %0 = vector.load %arg4[%c0, %c0_0, %c0_1] : memref<4x1x128xf32, #tpu.memory_space<vmem>>, vector<1x1x128xf32>
    %1 = vector.shape_cast %0 : vector<1x1x128xf32> to vector<1x128xf32>
    %c0_2 = arith.constant 0 : index
    %c0_3 = arith.constant 0 : index
    %2 = vector.load %arg1[%c0_2, %c0_3] : memref<4x16xf32, #tpu.memory_space<vmem>>, vector<4x16xf32>
    %c0_4 = arith.constant 0 : index
    %c0_5 = arith.constant 0 : index
    %3 = vector.load %arg3[%c0_4, %c0_5] : memref<40x128xf32, #tpu.memory_space<vmem>>, vector<16x128xf32>
    %cst = arith.constant dense<0.000000e+00> : vector<4x128xf32>
    %4 = tpu.matmul %2, %3, %cst {dimension_numbers = #tpu.dot_dimension_numbers<[1], [0], [0], [1], [0, 0, 1, 1], [], []>} : vector<4x16xf32>, vector<16x128xf32>, vector<4x128xf32> -> vector<4x128xf32>
    %5 = vector.broadcast %1 : vector<1x128xf32> to vector<4x128xf32>
    %6 = arith.addf %5, %4 : vector<4x128xf32>
    %c0_6 = arith.constant 0 : index
    %c0_7 = arith.constant 0 : index
    %7 = vector.load %arg2[%c0_6, %c0_7] : memref<4x24xf32, #tpu.memory_space<vmem>>, vector<4x24xf32>
    %c16 = arith.constant 16 : index
    %c0_8 = arith.constant 0 : index
    %8 = vector.load %arg3[%c16, %c0_8] : memref<40x128xf32, #tpu.memory_space<vmem>>, vector<24x128xf32>
    %cst_9 = arith.constant dense<0.000000e+00> : vector<4x128xf32>
    %9 = tpu.matmul %7, %8, %cst_9 {dimension_numbers = #tpu.dot_dimension_numbers<[1], [0], [0], [1], [0, 0, 1, 1], [], []>} : vector<4x24xf32>, vector<24x128xf32>, vector<4x128xf32> -> vector<4x128xf32>
    %10 = arith.addf %6, %9 : vector<4x128xf32>
    %cst_10 = arith.constant 5.000000e-01 : f32
    %11 = vector.broadcast %cst_10 : f32 to vector<4x128xf32>
    %12 = arith.mulf %11, %10 : vector<4x128xf32>
    %cst_11 = arith.constant 0.707106769 : f32
    %13 = vector.broadcast %cst_11 : f32 to vector<4x128xf32>
    %14 = arith.mulf %10, %13 : vector<4x128xf32>
    %15 = math.erf %14 : vector<4x128xf32>
    %cst_12 = arith.constant 1.000000e+00 : f32
    %16 = vector.broadcast %cst_12 : f32 to vector<4x128xf32>
    %17 = arith.addf %16, %15 : vector<4x128xf32>
    %18 = arith.mulf %12, %17 : vector<4x128xf32>
    %19 = vector.extract_strided_slice %18 {offsets = [0, 0], sizes = [4, 32], strides = [1, 1]} : vector<4x128xf32> to vector<4x32xf32>
    %c0_13 = arith.constant 0 : index
    %c0_14 = arith.constant 0 : index
    %20 = vector.load %arg5[%c0_13, %c0_14] : memref<32x128xf32, #tpu.memory_space<vmem>>, vector<32x128xf32>
    %cst_15 = arith.constant dense<0.000000e+00> : vector<4x128xf32>
    %21 = tpu.matmul %19, %20, %cst_15 {dimension_numbers = #tpu.dot_dimension_numbers<[1], [0], [0], [1], [0, 0, 1, 1], [], []>} : vector<4x32xf32>, vector<32x128xf32>, vector<4x128xf32> -> vector<4x128xf32>
    %c1 = arith.constant 1 : index
    %c0_16 = arith.constant 0 : index
    %c0_17 = arith.constant 0 : index
    %22 = vector.load %arg4[%c1, %c0_16, %c0_17] : memref<4x1x128xf32, #tpu.memory_space<vmem>>, vector<1x1x128xf32>
    %23 = vector.shape_cast %22 : vector<1x1x128xf32> to vector<1x128xf32>
    %24 = vector.broadcast %23 : vector<1x128xf32> to vector<4x128xf32>
    %25 = arith.addf %21, %24 : vector<4x128xf32>
    %cst_18 = arith.constant 5.000000e-01 : f32
    %26 = vector.broadcast %cst_18 : f32 to vector<4x128xf32>
    %27 = arith.mulf %26, %25 : vector<4x128xf32>
    %cst_19 = arith.constant 0.707106769 : f32
    %28 = vector.broadcast %cst_19 : f32 to vector<4x128xf32>
    %29 = arith.mulf %25, %28 : vector<4x128xf32>
    %30 = math.erf %29 : vector<4x128xf32>
    %cst_20 = arith.constant 1.000000e+00 : f32
    %31 = vector.broadcast %cst_20 : f32 to vector<4x128xf32>
    %32 = arith.addf %31, %30 : vector<4x128xf32>
    %33 = arith.mulf %27, %32 : vector<4x128xf32>
    %34 = vector.extract_strided_slice %33 {offsets = [0, 0], sizes = [4, 32], strides = [1, 1]} : vector<4x128xf32> to vector<4x32xf32>
    %c0_21 = arith.constant 0 : index
    %c0_22 = arith.constant 0 : index
    %35 = vector.load %arg6[%c0_21, %c0_22] : memref<32x128xf32, #tpu.memory_space<vmem>>, vector<32x128xf32>
    %cst_23 = arith.constant dense<0.000000e+00> : vector<4x128xf32>
    %36 = tpu.matmul %34, %35, %cst_23 {dimension_numbers = #tpu.dot_dimension_numbers<[1], [0], [0], [1], [0, 0, 1, 1], [], []>} : vector<4x32xf32>, vector<32x128xf32>, vector<4x128xf32> -> vector<4x128xf32>
    %c2 = arith.constant 2 : index
    %c0_24 = arith.constant 0 : index
    %c0_25 = arith.constant 0 : index
    %37 = vector.load %arg4[%c2, %c0_24, %c0_25] : memref<4x1x128xf32, #tpu.memory_space<vmem>>, vector<1x1x128xf32>
    %38 = vector.shape_cast %37 : vector<1x1x128xf32> to vector<1x128xf32>
    %39 = vector.broadcast %38 : vector<1x128xf32> to vector<4x128xf32>
    %40 = arith.addf %36, %39 : vector<4x128xf32>
    %cst_26 = arith.constant 5.000000e-01 : f32
    %41 = vector.broadcast %cst_26 : f32 to vector<4x128xf32>
    %42 = arith.mulf %41, %40 : vector<4x128xf32>
    %cst_27 = arith.constant 0.707106769 : f32
    %43 = vector.broadcast %cst_27 : f32 to vector<4x128xf32>
    %44 = arith.mulf %40, %43 : vector<4x128xf32>
    %45 = math.erf %44 : vector<4x128xf32>
    %cst_28 = arith.constant 1.000000e+00 : f32
    %46 = vector.broadcast %cst_28 : f32 to vector<4x128xf32>
    %47 = arith.addf %46, %45 : vector<4x128xf32>
    %48 = arith.mulf %42, %47 : vector<4x128xf32>
    %49 = vector.extract_strided_slice %48 {offsets = [0, 0], sizes = [4, 32], strides = [1, 1]} : vector<4x128xf32> to vector<4x32xf32>
    %c0_29 = arith.constant 0 : index
    %c0_30 = arith.constant 0 : index
    %50 = vector.load %arg7[%c0_29, %c0_30] : memref<32x128xf32, #tpu.memory_space<vmem>>, vector<32x128xf32>
    %cst_31 = arith.constant dense<0.000000e+00> : vector<4x128xf32>
    %51 = tpu.matmul %49, %50, %cst_31 {dimension_numbers = #tpu.dot_dimension_numbers<[1], [0], [0], [1], [0, 0, 1, 1], [], []>} : vector<4x32xf32>, vector<32x128xf32>, vector<4x128xf32> -> vector<4x128xf32>
    %c3 = arith.constant 3 : index
    %c0_32 = arith.constant 0 : index
    %c0_33 = arith.constant 0 : index
    %52 = vector.load %arg4[%c3, %c0_32, %c0_33] : memref<4x1x128xf32, #tpu.memory_space<vmem>>, vector<1x1x128xf32>
    %53 = vector.shape_cast %52 : vector<1x1x128xf32> to vector<1x128xf32>
    %54 = vector.broadcast %53 : vector<1x128xf32> to vector<4x128xf32>
    %55 = arith.addf %51, %54 : vector<4x128xf32>
    %56 = vector.extract_strided_slice %55 {offsets = [0, 0], sizes = [4, 16], strides = [1, 1]} : vector<4x128xf32> to vector<4x16xf32>
    %c0_34 = arith.constant 0 : index
    %c0_35 = arith.constant 0 : index
    %57 = vector.load %arg8[%c0_34, %c0_35] : memref<4x16xf32, #tpu.memory_space<vmem>>, vector<4x16xf32>
    tpu.vector_store %arg8[%c0_34, %c0_35], %56 {strides = array<i32>} : memref<4x16xf32, #tpu.memory_space<vmem>>, vector<4x16xf32>,
    return
  }
  func.func @transform_0(%arg0: i32) -> (i32, i32) {
    %c0_i32 = arith.constant 0 : i32
    %c0_i32_0 = arith.constant 0 : i32
    return %arg0, %c0_i32 : i32, i32
  }
  func.func @transform_1(%arg0: i32) -> (i32, i32) {
    %c0_i32 = arith.constant 0 : i32
    %c0_i32_0 = arith.constant 0 : i32
    return %arg0, %c0_i32 : i32, i32
  }
  func.func @transform_2(%arg0: i32) -> (i32, i32) {
    %c0_i32 = arith.constant 0 : i32
    %c0_i32_0 = arith.constant 0 : i32
    %c0_i32_1 = arith.constant 0 : i32
    return %c0_i32, %c0_i32_0 : i32, i32
  }
  func.func @transform_3(%arg0: i32) -> (i32, i32, i32) {
    %c0_i32 = arith.constant 0 : i32
    %c0_i32_0 = arith.constant 0 : i32
    %c0_i32_1 = arith.constant 0 : i32
    %c0_i32_2 = arith.constant 0 : i32
    return %c0_i32, %c0_i32_0, %c0_i32_1 : i32, i32, i32
  }
  func.func @transform_4(%arg0: i32) -> (i32, i32) {
    %c0_i32 = arith.constant 0 : i32
    %c0_i32_0 = arith.constant 0 : i32
    %c0_i32_1 = arith.constant 0 : i32
    return %c0_i32, %c0_i32_0 : i32, i32
  }
  func.func @transform_5(%arg0: i32) -> (i32, i32) {
    %c0_i32 = arith.constant 0 : i32
    %c0_i32_0 = arith.constant 0 : i32
    %c0_i32_1 = arith.constant 0 : i32
    return %c0_i32, %c0_i32_0 : i32, i32
  }
  func.func @transform_6(%arg0: i32) -> (i32, i32) {
    %c0_i32 = arith.constant 0 : i32
    %c0_i32_0 = arith.constant 0 : i32
    %c0_i32_1 = arith.constant 0 : i32
    return %c0_i32, %c0_i32_0 : i32, i32
  }
  func.func @transform_7(%arg0: i32) -> (i32, i32) {
    %c0_i32 = arith.constant 0 : i32
    %c0_i32_0 = arith.constant 0 : i32
    return %arg0, %c0_i32 : i32, i32
  }
}

</mosaic_0001>

<llo_original>
// kernel: tpu_custom_call.1
$region0: #{tpu_custom_call.1}
  #allocation0 [shape = 'u32[]', space=smem, size = 0x4, offset = 0x4, fixed_abs, tag = 'smem constant byte address 0x4 - core index']
  #allocation1 [shape = 'u32[144,128]{1,0:T(1,128)}', space=vmem, size = 0x12000, scoped, tag = 'internal scratch']
  %s0 = inlined_call_operand.hbm [shape: f32[4,16], index: 0, kind: input, shape index: {}]
  %s1 = inlined_call_operand.hbm [shape: f32[4,24], index: 1, kind: input, shape index: {}]
  %s2 = inlined_call_operand.hbm [shape: f32[40,128], index: 2, kind: input, shape index: {}]
  %s3 = inlined_call_operand.vmem [shape: f32[4,1,128], index: 3, kind: input, shape index: {}]
  %s4 = inlined_call_operand.hbm [shape: f32[32,128], index: 4, kind: input, shape index: {}]
  %s5 = inlined_call_operand.hbm [shape: f32[32,128], index: 5, kind: input, shape index: {}]
  %s6 = inlined_call_operand.hbm [shape: f32[32,128], index: 6, kind: input, shape index: {}]
  %s7 = inlined_call_operand.hbm [shape: f32[4,16], index: 7, kind: output, shape index: {}]
  %s8 = sld [smem:[#allocation0]]
  $region62: #{tpu_custom_call.1} parent=0
    _
  %s10 = ssub.s32 1, %s8
  %s11 = scalar_select 0, %s10, %s8
  $region1: #{tpu_custom_call.1} parent=0
    #allocation2 [shape = 'u8[2048]{0}', space=vmem, size = 0x800, scoped, tag = 'input window, operand 0, single buffered']
    #allocation3 [shape = 's32[1]{0}', space=sflag, size = 0x4, scoped, tag = 'scoped memory for tpu_custom_call.1']
    #allocation4 [shape = 's32[1]{0}', space=sflag, size = 0x4, scoped, tag = 'scoped memory for tpu_custom_call.1']
    #allocation5 [shape = 'u8[2048]{0}', space=vmem, size = 0x800, scoped, tag = 'input window, operand 1, single buffered']
    #allocation6 [shape = 's32[1]{0}', space=sflag, size = 0x4, scoped, tag = 'scoped memory for tpu_custom_call.1']
    #allocation7 [shape = 'u8[20480]{0}', space=vmem, size = 0x5000, scoped, tag = 'input window, operand 2, single buffered']
    #allocation8 [shape = 'u8[16384]{0}', space=vmem, size = 0x4000, scoped, tag = 'input window, operand 4, single buffered']
    #allocation9 [shape = 's32[1]{0}', space=sflag, size = 0x4, scoped, tag = 'scoped memory for tpu_custom_call.1']
    #allocation10 [shape = 'u8[16384]{0}', space=vmem, size = 0x4000, scoped, tag = 'input window, operand 5, single buffered']
    #allocation11 [shape = 'u8[16384]{0}', space=vmem, size = 0x4000, scoped, tag = 'input window, operand 6, single buffered']
    #allocation12 [shape = 's32[1]{0}', space=sflag, size = 0x4, scoped, tag = 'scoped memory for tpu_custom_call.1']
    #allocation13 [shape = 'u8[2048]{0}', space=vmem, size = 0x800, scoped, tag = 'output window, operand 0, single buffered']
    %12 = vsyncpa [#allocation3], 0
    %13 = vsyncpa [#allocation6], 0
    %14 = vsyncpa [#allocation9], 0
    %15 = vsyncpa [#allocation12], 0
    %16 = vsyncpa [#allocation4], 0
    // Predicated region
    $region2: #{tpu_custom_call.1} parent=1 // pred_check
      _
    $region3: #{tpu_custom_call.1} parent=1 // pred_check_branch
      %18 = sbr.rel (0) target = $region5
    $region4: #{tpu_custom_call.1} parent=1 // pred_region
      %s20 = ssub.s32 64, 64
      %21 = vsyncadd [#allocation3], %s20
      %s23 = sshll.u32 [#allocation2], 4
      %s24 = int_to_ptr.vmem [resolvable:$true] %s23
      %26 = dma.hbm_to_vmem [thread:$0]  %s0, 64, %s24, [#allocation3]
    $region5: #{tpu_custom_call.1} parent=1 // pred_fallthru
      _
    // Predicated region
    $region6: #{tpu_custom_call.1} parent=1 // pred_check
      _
    $region7: #{tpu_custom_call.1} parent=1 // pred_check_branch
      %28 = sbr.rel (0) target = $region9
    $region8: #{tpu_custom_call.1} parent=1 // pred_region
      %s30 = ssub.s32 64, 64
      %31 = vsyncadd [#allocation6], %s30
      %s33 = sshll.u32 [#allocation5], 4
      %s34 = int_to_ptr.vmem [resolvable:$true] %s33
      %36 = dma.hbm_to_vmem [thread:$0]  %s1, 64, %s34, [#allocation6]
    $region9: #{tpu_custom_call.1} parent=1 // pred_fallthru
      _
    // Predicated region
    $region10: #{tpu_custom_call.1} parent=1 // pred_check
      _
    $region11: #{tpu_custom_call.1} parent=1 // pred_check_branch
      %38 = sbr.rel (0) target = $region13
    $region12: #{tpu_custom_call.1} parent=1 // pred_region
      %s40 = ssub.s32 640, 640
      %41 = vsyncadd [#allocation6], %s40
      %s42 = sshll.u32 [#allocation7], 4
      %s43 = int_to_ptr.vmem [resolvable:$true] %s42
      %48 = dma.hbm_to_vmem [thread:$0]  %s2, 640, %s43, [#allocation6], 128, 128, 8
    $region13: #{tpu_custom_call.1} parent=1 // pred_fallthru
      _
    // Predicated region
    $region14: #{tpu_custom_call.1} parent=1 // pred_check
      _
    $region15: #{tpu_custom_call.1} parent=1 // pred_check_branch
      %50 = sbr.rel (0) target = $region17
    $region16: #{tpu_custom_call.1} parent=1 // pred_region
      _
    $region17: #{tpu_custom_call.1} parent=1 // pred_fallthru
      _
    // Predicated region
    $region18: #{tpu_custom_call.1} parent=1 // pred_check
      _
    $region19: #{tpu_custom_call.1} parent=1 // pred_check_branch
      %52 = sbr.rel (0) target = $region21
    $region20: #{tpu_custom_call.1} parent=1 // pred_region
      %s54 = ssub.s32 512, 512
      %55 = vsyncadd [#allocation9], %s54
      %s56 = sshll.u32 [#allocation8], 4
      %s57 = int_to_ptr.vmem [resolvable:$true] %s56
      %62 = dma.hbm_to_vmem [thread:$0]  %s4, 512, %s57, [#allocation9], 128, 128, 8
    $region21: #{tpu_custom_call.1} parent=1 // pred_fallthru
      _
    // Predicated region
    $region22: #{tpu_custom_call.1} parent=1 // pred_check
      _
    $region23: #{tpu_custom_call.1} parent=1 // pred_check_branch
      %64 = sbr.rel (0) target = $region25
    $region24: #{tpu_custom_call.1} parent=1 // pred_region
      %s66 = ssub.s32 512, 512
      %67 = vsyncadd [#allocation9], %s66
      %s68 = sshll.u32 [#allocation10], 4
      %s69 = int_to_ptr.vmem [resolvable:$true] %s68
      %74 = dma.hbm_to_vmem [thread:$0]  %s5, 512, %s69, [#allocation9], 128, 128, 8
    $region25: #{tpu_custom_call.1} parent=1 // pred_fallthru
      _
    // Predicated region
    $region26: #{tpu_custom_call.1} parent=1 // pred_check
      _
    $region27: #{tpu_custom_call.1} parent=1 // pred_check_branch
      %76 = sbr.rel (0) target = $region29
    $region28: #{tpu_custom_call.1} parent=1 // pred_region
      %s78 = ssub.s32 512, 512
      %79 = vsyncadd [#allocation12], %s78
      %s80 = sshll.u32 [#allocation11], 4
      %s81 = int_to_ptr.vmem [resolvable:$true] %s80
      %86 = dma.hbm_to_vmem [thread:$0]  %s6, 512, %s81, [#allocation12], 128, 128, 8
    $region29: #{tpu_custom_call.1} parent=1 // pred_fallthru
      _
    // Predicated region
    $region30: #{tpu_custom_call.1} parent=1 // pred_check
      _
    $region31: #{tpu_custom_call.1} parent=1 // pred_check_branch
      %88 = sbr.rel (0) target = $region33
    $region32: #{tpu_custom_call.1} parent=1 // pred_region
      %89 = dma.done [#allocation3], 64
    $region33: #{tpu_custom_call.1} parent=1 // pred_fallthru
      _
    // Predicated region
    $region34: #{tpu_custom_call.1} parent=1 // pred_check
      _
    $region35: #{tpu_custom_call.1} parent=1 // pred_check_branch
      %91 = sbr.rel (0) target = $region37
    $region36: #{tpu_custom_call.1} parent=1 // pred_region
      %92 = dma.done [#allocation6], 64
    $region37: #{tpu_custom_call.1} parent=1 // pred_fallthru
      _
    // Predicated region
    $region38: #{tpu_custom_call.1} parent=1 // pred_check
      _
    $region39: #{tpu_custom_call.1} parent=1 // pred_check_branch
      %94 = sbr.rel (0) target = $region41
    $region40: #{tpu_custom_call.1} parent=1 // pred_region
      %95 = dma.done [#allocation6], 640
    $region41: #{tpu_custom_call.1} parent=1 // pred_fallthru
      _
    // Predicated region
    $region42: #{tpu_custom_call.1} parent=1 // pred_check
      _
    $region43: #{tpu_custom_call.1} parent=1 // pred_check_branch
      %97 = sbr.rel (0) target = $region45
    $region44: #{tpu_custom_call.1} parent=1 // pred_region
      %98 = dma.done [#allocation9], 512
    $region45: #{tpu_custom_call.1} parent=1 // pred_fallthru
      _
    // Predicated region
    $region46: #{tpu_custom_call.1} parent=1 // pred_check
      _
    $region47: #{tpu_custom_call.1} parent=1 // pred_check_branch
      %100 = sbr.rel (0) target = $region49
    $region48: #{tpu_custom_call.1} parent=1 // pred_region
      %101 = dma.done [#allocation9], 512
    $region49: #{tpu_custom_call.1} parent=1 // pred_fallthru
      _
    // Predicated region
    $region50: #{tpu_custom_call.1} parent=1 // pred_check
      _
    $region51: #{tpu_custom_call.1} parent=1 // pred_check_branch
      %103 = sbr.rel (0) target = $region53
    $region52: #{tpu_custom_call.1} parent=1 // pred_region
      %104 = dma.done [#allocation12], 512
    $region53: #{tpu_custom_call.1} parent=1 // pred_fallthru
      _
    %v105 = vld [vmem:[%s3] sm:$0x1]
    %v106 = vld [vmem:[#allocation2] sm:$0xf]
    %v107 = vld [vmem:[#allocation7] sm:$0xff]
    %v108 = vld [vmem:[#allocation7 + $0x8] sm:$0xff]
    %vm109 = vcmask 130048
    %v111 = vsel %vm109, %v106, 0
    %113 = vmatprep.subr.mxu0 0.0
    %114 = vmatpush1.msra.mxu0 %v107
    %115 = vmatprep.subr.mxu0 0.0
    %116 = vmatpush1.msra.mxu0 %v108
    %117 = vmatprep.subr.mxu0 0.0
    %118 = vmatpush1.msra.mxu0 0.0
    %119 = vmatprep.subr.mxu0 0.0
    %120 = vmatpush1.msra.mxu0 0.0
    %121 = vmatprep.subr.mxu0 0.0
    %122 = vmatpush1.msra.mxu0 0.0
    %123 = vmatprep.subr.mxu0 0.0
    %124 = vmatpush1.msra.mxu0 0.0
    %125 = vmatprep.subr.mxu0 0.0
    %126 = vmatpush1.msra.mxu0 0.0
    %127 = vmatprep.subr.mxu0 0.0
    %128 = vmatpush1.msra.mxu0 0.0
    %129 = vmatprep.subr.mxu0 0.0
    %130 = vmatpush1.msra.mxu0 0.0
    %131 = vmatprep.subr.mxu0 0.0
    %132 = vmatpush1.msra.mxu0 0.0
    %133 = vmatprep.subr.mxu0 0.0
    %134 = vmatpush1.msra.mxu0 0.0
    %135 = vmatprep.subr.mxu0 0.0
    %136 = vmatpush1.msra.mxu0 0.0
    %137 = vmatprep.subr.mxu0 0.0
    %138 = vmatpush1.msra.mxu0 0.0
    %139 = vmatprep.subr.mxu0 0.0
    %140 = vmatpush1.msra.mxu0 0.0
    %141 = vmatprep.subr.mxu0 0.0
    %142 = vmatpush1.msra.mxu0 0.0
    %143 = vmatprep.subr.mxu0 0.0
    %144 = vmatpush1.msra.mxu0 0.0
    %145 = vmatprep.subr.mxu0 0.0
    %146 = vmatpush1.msra.mxu0 0.0
    %147 = vmatprep.subr.mxu0 0.0
    %148 = vmatpush1.msra.mxu0 0.0
    %149 = vmatprep.subr.mxu0 0.0
    %150 = vmatpush1.msra.mxu0 0.0
    %151 = vmatprep.subr.mxu0 0.0
    %152 = vmatpush1.msra.mxu0 0.0
    %153 = vmatprep.subr.mxu0 0.0
    %154 = vmatpush1.msra.mxu0 0.0
    %155 = vmatprep.subr.mxu0 0.0
    %156 = vmatpush1.msra.mxu0 0.0
    %157 = vmatprep.subr.mxu0 0.0
    %158 = vmatpush1.msra.mxu0 0.0
    %159 = vmatprep.subr.mxu0 0.0
    %160 = vmatpush1.msra.mxu0 0.0
    %161 = vmatprep.subr.mxu0 0.0
    %162 = vmatpush1.msra.mxu0 0.0
    %163 = vmatprep.subr.mxu0 0.0
    %164 = vmatpush1.msra.mxu0 0.0
    %165 = vmatprep.subr.mxu0 0.0
    %166 = vmatpush1.msra.mxu0 0.0
    %167 = vmatprep.subr.mxu0 0.0
    %168 = vmatpush1.msra.mxu0 0.0
    %169 = vmatprep.subr.mxu0 0.0
    %170 = vmatpush1.msra.mxu0 0.0
    %171 = vmatprep.subr.mxu0 0.0
    %172 = vmatpush1.msra.mxu0 0.0
    %173 = vmatprep.subr.mxu0 0.0
    %174 = vmatpush1.msra.mxu0 0.0
    %175 = vmatprep.subr.mxu0 0.0
    %176 = vmatpush1.msra.mxu0 0.0
    %177 = vmatprep.mubr.f32.mxu0 0.0
    %178 = vmatmul.mubr.f32.gmra.mrb[0].mxu0 %v111
    %v179 = vpop.f32.mrb[0].mxu0
    %v180 = vadd.f32 0.0, %v179
    %v181 = vpop.f32.mrb[0].mxu0
    %182 = vdwg.mxu0
    %v184 = vlaneseq
    %v185 = vshrl.u32 %v184, 7
    %v186 = vsub.s32 0, %v185
    %v187 = vrot.slane %v105, %v186
    %v189 = vadd.f32 %v187, %v180
    %v190 = vld [vmem:[#allocation5] sm:$0xf]
    %v191 = vld [vmem:[#allocation7 + $0x10] sm:$0xff]
    %v192 = vld [vmem:[#allocation7 + $0x18] sm:$0xff]
    %v193 = vld [vmem:[#allocation7 + $0x20] sm:$0xff]
    %vm194 = vcmask 195584
    %v196 = vsel %vm194, %v190, 0
    %198 = vmatprep.subr.mxu0 0.0
    %199 = vmatpush1.msra.mxu0 %v191
    %200 = vmatprep.subr.mxu0 0.0
    %201 = vmatpush1.msra.mxu0 %v192
    %202 = vmatprep.subr.mxu0 0.0
    %203 = vmatpush1.msra.mxu0 %v193
    %204 = vmatprep.subr.mxu0 0.0
    %205 = vmatpush1.msra.mxu0 0.0
    %206 = vmatprep.subr.mxu0 0.0
    %207 = vmatpush1.msra.mxu0 0.0
    %208 = vmatprep.subr.mxu0 0.0
    %209 = vmatpush1.msra.mxu0 0.0
    %210 = vmatprep.subr.mxu0 0.0
    %211 = vmatpush1.msra.mxu0 0.0
    %212 = vmatprep.subr.mxu0 0.0
    %213 = vmatpush1.msra.mxu0 0.0
    %214 = vmatprep.subr.mxu0 0.0
    %215 = vmatpush1.msra.mxu0 0.0
    %216 = vmatprep.subr.mxu0 0.0
    %217 = vmatpush1.msra.mxu0 0.0
    %218 = vmatprep.subr.mxu0 0.0
    %219 = vmatpush1.msra.mxu0 0.0
    %220 = vmatprep.subr.mxu0 0.0
    %221 = vmatpush1.msra.mxu0 0.0
    %222 = vmatprep.subr.mxu0 0.0
    %223 = vmatpush1.msra.mxu0 0.0
    %224 = vmatprep.subr.mxu0 0.0
    %225 = vmatpush1.msra.mxu0 0.0
    %226 = vmatprep.subr.mxu0 0.0
    %227 = vmatpush1.msra.mxu0 0.0
    %228 = vmatprep.subr.mxu0 0.0
    %229 = vmatpush1.msra.mxu0 0.0
    %230 = vmatprep.subr.mxu0 0.0
    %231 = vmatpush1.msra.mxu0 0.0
    %232 = vmatprep.subr.mxu0 0.0
    %233 = vmatpush1.msra.mxu0 0.0
    %234 = vmatprep.subr.mxu0 0.0
    %235 = vmatpush1.msra.mxu0 0.0
    %236 = vmatprep.subr.mxu0 0.0
    %237 = vmatpush1.msra.mxu0 0.0
    %238 = vmatprep.subr.mxu0 0.0
    %239 = vmatpush1.msra.mxu0 0.0
    %240 = vmatprep.subr.mxu0 0.0
    %241 = vmatpush1.msra.mxu0 0.0
    %242 = vmatprep.subr.mxu0 0.0
    %243 = vmatpush1.msra.mxu0 0.0
    %244 = vmatprep.subr.mxu0 0.0
    %245 = vmatpush1.msra.mxu0 0.0
    %246 = vmatprep.subr.mxu0 0.0
    %247 = vmatpush1.msra.mxu0 0.0
    %248 = vmatprep.subr.mxu0 0.0
    %249 = vmatpush1.msra.mxu0 0.0
    %250 = vmatprep.subr.mxu0 0.0
    %251 = vmatpush1.msra.mxu0 0.0
    %252 = vmatprep.subr.mxu0 0.0
    %253 = vmatpush1.msra.mxu0 0.0
    %254 = vmatprep.subr.mxu0 0.0
    %255 = vmatpush1.msra.mxu0 0.0
    %256 = vmatprep.subr.mxu0 0.0
    %257 = vmatpush1.msra.mxu0 0.0
    %258 = vmatprep.subr.mxu0 0.0
    %259 = vmatpush1.msra.mxu0 0.0
    %260 = vmatprep.subr.mxu0 0.0
    %261 = vmatpush1.msra.mxu0 0.0
    %262 = vmatprep.mubr.f32.mxu0 0.0
    %263 = vmatmul.mubr.f32.gmra.mrb[0].mxu0 %v196
    %v264 = vpop.f32.mrb[0].mxu0
    %v265 = vadd.f32 0.0, %v264
    %v266 = vpop.f32.mrb[0].mxu0
    %267 = vdwg.mxu0
    %v268 = vadd.f32 %v189, %v265
    %v269 = vmul.f32 %v268, 0.5
    %v270 = vmul.f32 %v268, 0.70710677
    %v271 = verf.f32.pop %v270
    %v272 = vadd.f32 %v271, 1.0
    %v273 = vmul.f32 %v269, %v272
    %v274 = vld [vmem:[#allocation8] sm:$0xff]
    %v275 = vld [vmem:[#allocation8 + $0x8] sm:$0xff]
    %v276 = vld [vmem:[#allocation8 + $0x10] sm:$0xff]
    %v277 = vld [vmem:[#allocation8 + $0x18] sm:$0xff]
    %s278 = scalar_lea.vmem %s3, 1
    %v279 = vld [vmem:[%s278] sm:$0x1]
    %v281 = vlaneseq
    %v282 = vshrl.u32 %v281, 7
    %v283 = vsub.s32 0, %v282
    %v284 = vrot.slane %v279, %v283
    %vm286 = vcmask 261120
    %v288 = vsel %vm286, %v273, 0
    %290 = vmatprep.subr.mxu0 0.0
    %291 = vmatpush1.msra.mxu0 %v274
    %292 = vmatprep.subr.mxu0 0.0
    %293 = vmatpush1.msra.mxu0 %v275
    %294 = vmatprep.subr.mxu0 0.0
    %295 = vmatpush1.msra.mxu0 %v276
    %296 = vmatprep.subr.mxu0 0.0
    %297 = vmatpush1.msra.mxu0 %v277
    %298 = vmatprep.subr.mxu0 0.0
    %299 = vmatpush1.msra.mxu0 0.0
    %300 = vmatprep.subr.mxu0 0.0
    %301 = vmatpush1.msra.mxu0 0.0
    %302 = vmatprep.subr.mxu0 0.0
    %303 = vmatpush1.msra.mxu0 0.0
    %304 = vmatprep.subr.mxu0 0.0
    %305 = vmatpush1.msra.mxu0 0.0
    %306 = vmatprep.subr.mxu0 0.0
    %307 = vmatpush1.msra.mxu0 0.0
    %308 = vmatprep.subr.mxu0 0.0
    %309 = vmatpush1.msra.mxu0 0.0
    %310 = vmatprep.subr.mxu0 0.0
    %311 = vmatpush1.msra.mxu0 0.0
    %312 = vmatprep.subr.mxu0 0.0
    %313 = vmatpush1.msra.mxu0 0.0
    %314 = vmatprep.subr.mxu0 0.0
    %315 = vmatpush1.msra.mxu0 0.0
    %316 = vmatprep.subr.mxu0 0.0
    %317 = vmatpush1.msra.mxu0 0.0
    %318 = vmatprep.subr.mxu0 0.0
    %319 = vmatpush1.msra.mxu0 0.0
    %320 = vmatprep.subr.mxu0 0.0
    %321 = vmatpush1.msra.mxu0 0.0
    %322 = vmatprep.subr.mxu0 0.0
    %323 = vmatpush1.msra.mxu0 0.0
    %324 = vmatprep.subr.mxu0 0.0
    %325 = vmatpush1.msra.mxu0 0.0
    %326 = vmatprep.subr.mxu0 0.0
    %327 = vmatpush1.msra.mxu0 0.0
    %328 = vmatprep.subr.mxu0 0.0
    %329 = vmatpush1.msra.mxu0 0.0
    %330 = vmatprep.subr.mxu0 0.0
    %331 = vmatpush1.msra.mxu0 0.0
    %332 = vmatprep.subr.mxu0 0.0
    %333 = vmatpush1.msra.mxu0 0.0
    %334 = vmatprep.subr.mxu0 0.0
    %335 = vmatpush1.msra.mxu0 0.0
    %336 = vmatprep.subr.mxu0 0.0
    %337 = vmatpush1.msra.mxu0 0.0
    %338 = vmatprep.subr.mxu0 0.0
    %339 = vmatpush1.msra.mxu0 0.0
    %340 = vmatprep.subr.mxu0 0.0
    %341 = vmatpush1.msra.mxu0 0.0
    %342 = vmatprep.subr.mxu0 0.0
    %343 = vmatpush1.msra.mxu0 0.0
    %344 = vmatprep.subr.mxu0 0.0
    %345 = vmatpush1.msra.mxu0 0.0
    %346 = vmatprep.subr.mxu0 0.0
    %347 = vmatpush1.msra.mxu0 0.0
    %348 = vmatprep.subr.mxu0 0.0
    %349 = vmatpush1.msra.mxu0 0.0
    %350 = vmatprep.subr.mxu0 0.0
    %351 = vmatpush1.msra.mxu0 0.0
    %352 = vmatprep.subr.mxu0 0.0
    %353 = vmatpush1.msra.mxu0 0.0
    %354 = vmatprep.mubr.f32.mxu0 0.0
    %355 = vmatmul.mubr.f32.gmra.mrb[0].mxu0 %v288
    %v356 = vpop.f32.mrb[0].mxu0
    %v357 = vadd.f32 %v284, %v356
    %v358 = vpop.f32.mrb[0].mxu0
    %359 = vdwg.mxu0
    %v360 = vmul.f32 %v357, 0.5
    %v361 = vmul.f32 %v357, 0.70710677
    %v362 = verf.f32.pop %v361
    %v363 = vadd.f32 %v362, 1.0
    %v364 = vmul.f32 %v360, %v363
    %v365 = vld [vmem:[#allocation10] sm:$0xff]
    %v366 = vld [vmem:[#allocation10 + $0x8] sm:$0xff]
    %v367 = vld [vmem:[#allocation10 + $0x10] sm:$0xff]
    %v368 = vld [vmem:[#allocation10 + $0x18] sm:$0xff]
    %s369 = scalar_lea.vmem %s3, 2
    %v370 = vld [vmem:[%s369] sm:$0x1]
    %v372 = vlaneseq
    %v373 = vshrl.u32 %v372, 7
    %v374 = vsub.s32 0, %v373
    %v375 = vrot.slane %v370, %v374
    %v378 = vsel %vm286, %v364, 0
    %380 = vmatprep.subr.mxu0 0.0
    %381 = vmatpush1.msra.mxu0 %v365
    %382 = vmatprep.subr.mxu0 0.0
    %383 = vmatpush1.msra.mxu0 %v366
    %384 = vmatprep.subr.mxu0 0.0
    %385 = vmatpush1.msra.mxu0 %v367
    %386 = vmatprep.subr.mxu0 0.0
    %387 = vmatpush1.msra.mxu0 %v368
    %388 = vmatprep.subr.mxu0 0.0
    %389 = vmatpush1.msra.mxu0 0.0
    %390 = vmatprep.subr.mxu0 0.0
    %391 = vmatpush1.msra.mxu0 0.0
    %392 = vmatprep.subr.mxu0 0.0
    %393 = vmatpush1.msra.mxu0 0.0
    %394 = vmatprep.subr.mxu0 0.0
    %395 = vmatpush1.msra.mxu0 0.0
    %396 = vmatprep.subr.mxu0 0.0
    %397 = vmatpush1.msra.mxu0 0.0
    %398 = vmatprep.subr.mxu0 0.0
    %399 = vmatpush1.msra.mxu0 0.0
    %400 = vmatprep.subr.mxu0 0.0
    %401 = vmatpush1.msra.mxu0 0.0
    %402 = vmatprep.subr.mxu0 0.0
    %403 = vmatpush1.msra.mxu0 0.0
    %404 = vmatprep.subr.mxu0 0.0
    %405 = vmatpush1.msra.mxu0 0.0
    %406 = vmatprep.subr.mxu0 0.0
    %407 = vmatpush1.msra.mxu0 0.0
    %408 = vmatprep.subr.mxu0 0.0
    %409 = vmatpush1.msra.mxu0 0.0
    %410 = vmatprep.subr.mxu0 0.0
    %411 = vmatpush1.msra.mxu0 0.0
    %412 = vmatprep.subr.mxu0 0.0
    %413 = vmatpush1.msra.mxu0 0.0
    %414 = vmatprep.subr.mxu0 0.0
    %415 = vmatpush1.msra.mxu0 0.0
    %416 = vmatprep.subr.mxu0 0.0
    %417 = vmatpush1.msra.mxu0 0.0
    %418 = vmatprep.subr.mxu0 0.0
    %419 = vmatpush1.msra.mxu0 0.0
    %420 = vmatprep.subr.mxu0 0.0
    %421 = vmatpush1.msra.mxu0 0.0
    %422 = vmatprep.subr.mxu0 0.0
    %423 = vmatpush1.msra.mxu0 0.0
    %424 = vmatprep.subr.mxu0 0.0
    %425 = vmatpush1.msra.mxu0 0.0
    %426 = vmatprep.subr.mxu0 0.0
    %427 = vmatpush1.msra.mxu0 0.0
    %428 = vmatprep.subr.mxu0 0.0
    %429 = vmatpush1.msra.mxu0 0.0
    %430 = vmatprep.subr.mxu0 0.0
    %431 = vmatpush1.msra.mxu0 0.0
    %432 = vmatprep.subr.mxu0 0.0
    %433 = vmatpush1.msra.mxu0 0.0
    %434 = vmatprep.subr.mxu0 0.0
    %435 = vmatpush1.msra.mxu0 0.0
    %436 = vmatprep.subr.mxu0 0.0
    %437 = vmatpush1.msra.mxu0 0.0
    %438 = vmatprep.subr.mxu0 0.0
    %439 = vmatpush1.msra.mxu0 0.0
    %440 = vmatprep.subr.mxu0 0.0
    %441 = vmatpush1.msra.mxu0 0.0
    %442 = vmatprep.subr.mxu0 0.0
    %443 = vmatpush1.msra.mxu0 0.0
    %444 = vmatprep.mubr.f32.mxu0 0.0
    %445 = vmatmul.mubr.f32.gmra.mrb[0].mxu0 %v378
    %v446 = vpop.f32.mrb[0].mxu0
    %v447 = vadd.f32 %v375, %v446
    %v448 = vpop.f32.mrb[0].mxu0
    %449 = vdwg.mxu0
    %v450 = vmul.f32 %v447, 0.5
    %v451 = vmul.f32 %v447, 0.70710677
    %v452 = verf.f32.pop %v451
    %v453 = vadd.f32 %v452, 1.0
    %v454 = vmul.f32 %v450, %v453
    %v455 = vld [vmem:[#allocation11] sm:$0xff]
    %v456 = vld [vmem:[#allocation11 + $0x8] sm:$0xff]
    %v457 = vld [vmem:[#allocation11 + $0x10] sm:$0xff]
    %v458 = vld [vmem:[#allocation11 + $0x18] sm:$0xff]
    %s459 = scalar_lea.vmem %s3, 3
    %v460 = vld [vmem:[%s459] sm:$0x1]
    %v462 = vlaneseq
    %v463 = vshrl.u32 %v462, 7
    %v464 = vsub.s32 0, %v463
    %v465 = vrot.slane %v460, %v464
    %v468 = vsel %vm286, %v454, 0
    %470 = vmatprep.subr.mxu0 0.0
    %471 = vmatpush1.msra.mxu0 %v455
    %472 = vmatprep.subr.mxu0 0.0
    %473 = vmatpush1.msra.mxu0 %v456
    %474 = vmatprep.subr.mxu0 0.0
    %475 = vmatpush1.msra.mxu0 %v457
    %476 = vmatprep.subr.mxu0 0.0
    %477 = vmatpush1.msra.mxu0 %v458
    %478 = vmatprep.subr.mxu0 0.0
    %479 = vmatpush1.msra.mxu0 0.0
    %480 = vmatprep.subr.mxu0 0.0
    %481 = vmatpush1.msra.mxu0 0.0
    %482 = vmatprep.subr.mxu0 0.0
    %483 = vmatpush1.msra.mxu0 0.0
    %484 = vmatprep.subr.mxu0 0.0
    %485 = vmatpush1.msra.mxu0 0.0
    %486 = vmatprep.subr.mxu0 0.0
    %487 = vmatpush1.msra.mxu0 0.0
    %488 = vmatprep.subr.mxu0 0.0
    %489 = vmatpush1.msra.mxu0 0.0
    %490 = vmatprep.subr.mxu0 0.0
    %491 = vmatpush1.msra.mxu0 0.0
    %492 = vmatprep.subr.mxu0 0.0
    %493 = vmatpush1.msra.mxu0 0.0
    %494 = vmatprep.subr.mxu0 0.0
    %495 = vmatpush1.msra.mxu0 0.0
    %496 = vmatprep.subr.mxu0 0.0
    %497 = vmatpush1.msra.mxu0 0.0
    %498 = vmatprep.subr.mxu0 0.0
    %499 = vmatpush1.msra.mxu0 0.0
    %500 = vmatprep.subr.mxu0 0.0
    %501 = vmatpush1.msra.mxu0 0.0
    %502 = vmatprep.subr.mxu0 0.0
    %503 = vmatpush1.msra.mxu0 0.0
    %504 = vmatprep.subr.mxu0 0.0
    %505 = vmatpush1.msra.mxu0 0.0
    %506 = vmatprep.subr.mxu0 0.0
    %507 = vmatpush1.msra.mxu0 0.0
    %508 = vmatprep.subr.mxu0 0.0
    %509 = vmatpush1.msra.mxu0 0.0
    %510 = vmatprep.subr.mxu0 0.0
    %511 = vmatpush1.msra.mxu0 0.0
    %512 = vmatprep.subr.mxu0 0.0
    %513 = vmatpush1.msra.mxu0 0.0
    %514 = vmatprep.subr.mxu0 0.0
    %515 = vmatpush1.msra.mxu0 0.0
    %516 = vmatprep.subr.mxu0 0.0
    %517 = vmatpush1.msra.mxu0 0.0
    %518 = vmatprep.subr.mxu0 0.0
    %519 = vmatpush1.msra.mxu0 0.0
    %520 = vmatprep.subr.mxu0 0.0
    %521 = vmatpush1.msra.mxu0 0.0
    %522 = vmatprep.subr.mxu0 0.0
    %523 = vmatpush1.msra.mxu0 0.0
    %524 = vmatprep.subr.mxu0 0.0
    %525 = vmatpush1.msra.mxu0 0.0
    %526 = vmatprep.subr.mxu0 0.0
    %527 = vmatpush1.msra.mxu0 0.0
    %528 = vmatprep.subr.mxu0 0.0
    %529 = vmatpush1.msra.mxu0 0.0
    %530 = vmatprep.subr.mxu0 0.0
    %531 = vmatpush1.msra.mxu0 0.0
    %532 = vmatprep.subr.mxu0 0.0
    %533 = vmatpush1.msra.mxu0 0.0
    %534 = vmatprep.mubr.f32.mxu0 0.0
    %535 = vmatmul.mubr.f32.gmra.mrb[0].mxu0 %v468
    %v536 = vpop.f32.mrb[0].mxu0
    %v537 = vadd.f32 %v465, %v536
    %v538 = vpop.f32.mrb[0].mxu0
    %539 = vdwg.mxu0
    %vm540 = vcmask 125952
    %541 = vst.msk [vmem:[#allocation13] sm:$0xf] %vm540, %v537
    // Predicated region
    $region54: #{tpu_custom_call.1} parent=1 // pred_check
      _
    $region55: #{tpu_custom_call.1} parent=1 // pred_check_branch
      %543 = sbr.rel (0) target = $region57
    $region56: #{tpu_custom_call.1} parent=1 // pred_region
      %s545 = ssub.s32 64, 64
      %546 = vsyncadd [#allocation4], %s545
      %s548 = sshll.u32 [#allocation13], 4
      %s549 = int_to_ptr.vmem [resolvable:$true] %s548
      %551 = dma.vmem_to_hbm [thread:$0]  %s549, 64, %s7, [#allocation4]
    $region57: #{tpu_custom_call.1} parent=1 // pred_fallthru
      _
    // Predicated region
    $region58: #{tpu_custom_call.1} parent=1 // pred_check
      _
    $region59: #{tpu_custom_call.1} parent=1 // pred_check_branch
      %553 = sbr.rel (0) target = $region61
    $region60: #{tpu_custom_call.1} parent=1 // pred_region
      %554 = dma.done [#allocation4], 64
    $region61: #{tpu_custom_call.1} parent=1 // pred_fallthru
      _
    %555 = vsyncpa [#allocation3], 1
    %556 = vsyncpa [#allocation6], 1
    %557 = vsyncpa [#allocation9], 1
    %558 = vsyncpa [#allocation12], 1
    %559 = vsyncpa [#allocation4], 1

// kernel: tpu_custom_call.1
$region0: #{tpu_custom_call.1}
  #allocation0 [shape = 'u32[]', space=smem, size = 0x4, offset = 0x4, fixed_abs, tag = 'smem constant byte address 0x4 - core index']
  #allocation1 [shape = 'u32[144,128]{1,0:T(1,128)}', space=vmem, size = 0x12000, scoped, tag = 'internal scratch']
  %s0 = inlined_call_operand.hbm [shape: f32[4,16], index: 0, kind: input, shape index: {}]
  %s1 = inlined_call_operand.hbm [shape: f32[4,24], index: 1, kind: input, shape index: {}]
  %s2 = inlined_call_operand.hbm [shape: f32[40,128], index: 2, kind: input, shape index: {}]
  %s3 = inlined_call_operand.vmem [shape: f32[4,1,128], index: 3, kind: input, shape index: {}]
  %s4 = inlined_call_operand.hbm [shape: f32[32,128], index: 4, kind: input, shape index: {}]
  %s5 = inlined_call_operand.hbm [shape: f32[32,128], index: 5, kind: input, shape index: {}]
  %s6 = inlined_call_operand.hbm [shape: f32[32,128], index: 6, kind: input, shape index: {}]
  %s7 = inlined_call_operand.hbm [shape: f32[4,16], index: 7, kind: output, shape index: {}]
  %s8 = sld [smem:[#allocation0]]
  $region62: #{tpu_custom_call.1} parent=0
    _
  %s10 = ssub.s32 1, %s8
  %s11 = scalar_select 0, %s10, %s8
  $region1: #{tpu_custom_call.1} parent=0
    #allocation2 [shape = 'u8[2048]{0}', space=vmem, size = 0x800, scoped, tag = 'input window, operand 0, single buffered']
    #allocation3 [shape = 's32[1]{0}', space=sflag, size = 0x4, scoped, tag = 'scoped memory for tpu_custom_call.1']
    #allocation4 [shape = 's32[1]{0}', space=sflag, size = 0x4, scoped, tag = 'scoped memory for tpu_custom_call.1']
    #allocation5 [shape = 'u8[2048]{0}', space=vmem, size = 0x800, scoped, tag = 'input window, operand 1, single buffered']
    #allocation6 [shape = 's32[1]{0}', space=sflag, size = 0x4, scoped, tag = 'scoped memory for tpu_custom_call.1']
    #allocation7 [shape = 'u8[20480]{0}', space=vmem, size = 0x5000, scoped, tag = 'input window, operand 2, single buffered']
    #allocation8 [shape = 'u8[16384]{0}', space=vmem, size = 0x4000, scoped, tag = 'input window, operand 4, single buffered']
    #allocation9 [shape = 's32[1]{0}', space=sflag, size = 0x4, scoped, tag = 'scoped memory for tpu_custom_call.1']
    #allocation10 [shape = 'u8[16384]{0}', space=vmem, size = 0x4000, scoped, tag = 'input window, operand 5, single buffered']
    #allocation11 [shape = 'u8[16384]{0}', space=vmem, size = 0x4000, scoped, tag = 'input window, operand 6, single buffered']
    #allocation12 [shape = 's32[1]{0}', space=sflag, size = 0x4, scoped, tag = 'scoped memory for tpu_custom_call.1']
    #allocation13 [shape = 'u8[2048]{0}', space=vmem, size = 0x800, scoped, tag = 'output window, operand 0, single buffered']
    %12 = vsyncpa [#allocation3], 0
    %13 = vsyncpa [#allocation6], 0
    %14 = vsyncpa [#allocation9], 0
    %15 = vsyncpa [#allocation12], 0
    %16 = vsyncpa [#allocation4], 0
    // Predicated region
    $region2: #{tpu_custom_call.1} parent=1 // pred_check
      _
    $region3: #{tpu_custom_call.1} parent=1 // pred_check_branch
      %18 = sbr.rel (0) target = $region5
    $region4: #{tpu_custom_call.1} parent=1 // pred_region
      %s20 = ssub.s32 64, 64
      %21 = vsyncadd [#allocation3], %s20
      %s23 = sshll.u32 [#allocation2], 4
      %s24 = int_to_ptr.vmem [resolvable:$true] %s23
      %26 = dma.hbm_to_vmem [thread:$0]  %s0, 64, %s24, [#allocation3]
    $region5: #{tpu_custom_call.1} parent=1 // pred_fallthru
      _
    // Predicated region
    $region6: #{tpu_custom_call.1} parent=1 // pred_check
      _
    $region7: #{tpu_custom_call.1} parent=1 // pred_check_branch
      %28 = sbr.rel (0) target = $region9
    $region8: #{tpu_custom_call.1} parent=1 // pred_region
      %s30 = ssub.s32 64, 64
      %31 = vsyncadd [#allocation6], %s30
      %s33 = sshll.u32 [#allocation5], 4
      %s34 = int_to_ptr.vmem [resolvable:$true] %s33
      %36 = dma.hbm_to_vmem [thread:$0]  %s1, 64, %s34, [#allocation6]
    $region9: #{tpu_custom_call.1} parent=1 // pred_fallthru
      _
    // Predicated region
    $region10: #{tpu_custom_call.1} parent=1 // pred_check
      _
    $region11: #{tpu_custom_call.1} parent=1 // pred_check_branch
      %38 = sbr.rel (0) target = $region13
    $region12: #{tpu_custom_call.1} parent=1 // pred_region
      %s40 = ssub.s32 640, 640
      %41 = vsyncadd [#allocation6], %s40
      %s42 = sshll.u32 [#allocation7], 4
      %s43 = int_to_ptr.vmem [resolvable:$true] %s42
      %48 = dma.hbm_to_vmem [thread:$0]  %s2, 640, %s43, [#allocation6], 128, 128, 8
    $region13: #{tpu_custom_call.1} parent=1 // pred_fallthru
      _
    // Predicated region
    $region14: #{tpu_custom_call.1} parent=1 // pred_check
      _
    $region15: #{tpu_custom_call.1} parent=1 // pred_check_branch
      %50 = sbr.rel (0) target = $region17
    $region16: #{tpu_custom_call.1} parent=1 // pred_region
      _
    $region17: #{tpu_custom_call.1} parent=1 // pred_fallthru
      _
    // Predicated region
    $region18: #{tpu_custom_call.1} parent=1 // pred_check
      _
    $region19: #{tpu_custom_call.1} parent=1 // pred_check_branch
      %52 = sbr.rel (0) target = $region21
    $region20: #{tpu_custom_call.1} parent=1 // pred_region
      %s54 = ssub.s32 512, 512
      %55 = vsyncadd [#allocation9], %s54
      %s56 = sshll.u32 [#allocation8], 4
      %s57 = int_to_ptr.vmem [resolvable:$true] %s56
      %62 = dma.hbm_to_vmem [thread:$0]  %s4, 512, %s57, [#allocation9], 128, 128, 8
    $region21: #{tpu_custom_call.1} parent=1 // pred_fallthru
      _
    // Predicated region
    $region22: #{tpu_custom_call.1} parent=1 // pred_check
      _
    $region23: #{tpu_custom_call.1} parent=1 // pred_check_branch
      %64 = sbr.rel (0) target = $region25
    $region24: #{tpu_custom_call.1} parent=1 // pred_region
      %s66 = ssub.s32 512, 512
      %67 = vsyncadd [#allocation9], %s66
      %s68 = sshll.u32 [#allocation10], 4
      %s69 = int_to_ptr.vmem [resolvable:$true] %s68
      %74 = dma.hbm_to_vmem [thread:$0]  %s5, 512, %s69, [#allocation9], 128, 128, 8
    $region25: #{tpu_custom_call.1} parent=1 // pred_fallthru
      _
    // Predicated region
    $region26: #{tpu_custom_call.1} parent=1 // pred_check
      _
    $region27: #{tpu_custom_call.1} parent=1 // pred_check_branch
      %76 = sbr.rel (0) target = $region29
    $region28: #{tpu_custom_call.1} parent=1 // pred_region
      %s78 = ssub.s32 512, 512
      %79 = vsyncadd [#allocation12], %s78
      %s80 = sshll.u32 [#allocation11], 4
      %s81 = int_to_ptr.vmem [resolvable:$true] %s80
      %86 = dma.hbm_to_vmem [thread:$0]  %s6, 512, %s81, [#allocation12], 128, 128, 8
    $region29: #{tpu_custom_call.1} parent=1 // pred_fallthru
      _
    // Predicated region
    $region30: #{tpu_custom_call.1} parent=1 // pred_check
      _
    $region31: #{tpu_custom_call.1} parent=1 // pred_check_branch
      %88 = sbr.rel (0) target = $region33
    $region32: #{tpu_custom_call.1} parent=1 // pred_region
      %89 = dma.done [#allocation3], 64
    $region33: #{tpu_custom_call.1} parent=1 // pred_fallthru
      _
    // Predicated region
    $region34: #{tpu_custom_call.1} parent=1 // pred_check
      _
    $region35: #{tpu_custom_call.1} parent=1 // pred_check_branch
      %91 = sbr.rel (0) target = $region37
    $region36: #{tpu_custom_call.1} parent=1 // pred_region
      %92 = dma.done [#allocation6], 64
    $region37: #{tpu_custom_call.1} parent=1 // pred_fallthru
      _
    // Predicated region
    $region38: #{tpu_custom_call.1} parent=1 // pred_check
      _
    $region39: #{tpu_custom_call.1} parent=1 // pred_check_branch
      %94 = sbr.rel (0) target = $region41
    $region40: #{tpu_custom_call.1} parent=1 // pred_region
      %95 = dma.done [#allocation6], 640
    $region41: #{tpu_custom_call.1} parent=1 // pred_fallthru
      _
    // Predicated region
    $region42: #{tpu_custom_call.1} parent=1 // pred_check
      _
    $region43: #{tpu_custom_call.1} parent=1 // pred_check_branch
      %97 = sbr.rel (0) target = $region45
    $region44: #{tpu_custom_call.1} parent=1 // pred_region
      %98 = dma.done [#allocation9], 512
    $region45: #{tpu_custom_call.1} parent=1 // pred_fallthru
      _
    // Predicated region
    $region46: #{tpu_custom_call.1} parent=1 // pred_check
      _
    $region47: #{tpu_custom_call.1} parent=1 // pred_check_branch
      %100 = sbr.rel (0) target = $region49
    $region48: #{tpu_custom_call.1} parent=1 // pred_region
      %101 = dma.done [#allocation9], 512
    $region49: #{tpu_custom_call.1} parent=1 // pred_fallthru
      _
    // Predicated region
    $region50: #{tpu_custom_call.1} parent=1 // pred_check
      _
    $region51: #{tpu_custom_call.1} parent=1 // pred_check_branch
      %103 = sbr.rel (0) target = $region53
    $region52: #{tpu_custom_call.1} parent=1 // pred_region
      %104 = dma.done [#allocation12], 512
    $region53: #{tpu_custom_call.1} parent=1 // pred_fallthru
      _
    %v105 = vld [vmem:[%s3] sm:$0x1]
    %v106 = vld [vmem:[#allocation2] sm:$0xf]
    %v107 = vld [vmem:[#allocation7] sm:$0xff]
    %v108 = vld [vmem:[#allocation7 + $0x8] sm:$0xff]
    %vm109 = vcmask 130048
    %v111 = vsel %vm109, %v106, 0
    %113 = vmatprep.subr.mxu0 0.0
    %114 = vmatpush1.msra.mxu0 %v107
    %115 = vmatprep.subr.mxu0 0.0
    %116 = vmatpush1.msra.mxu0 %v108
    %117 = vmatprep.subr.mxu0 0.0
    %118 = vmatpush1.msra.mxu0 0.0
    %119 = vmatprep.subr.mxu0 0.0
    %120 = vmatpush1.msra.mxu0 0.0
    %121 = vmatprep.subr.mxu0 0.0
    %122 = vmatpush1.msra.mxu0 0.0
    %123 = vmatprep.subr.mxu0 0.0
    %124 = vmatpush1.msra.mxu0 0.0
    %125 = vmatprep.subr.mxu0 0.0
    %126 = vmatpush1.msra.mxu0 0.0
    %127 = vmatprep.subr.mxu0 0.0
    %128 = vmatpush1.msra.mxu0 0.0
    %129 = vmatprep.subr.mxu0 0.0
    %130 = vmatpush1.msra.mxu0 0.0
    %131 = vmatprep.subr.mxu0 0.0
    %132 = vmatpush1.msra.mxu0 0.0
    %133 = vmatprep.subr.mxu0 0.0
    %134 = vmatpush1.msra.mxu0 0.0
    %135 = vmatprep.subr.mxu0 0.0
    %136 = vmatpush1.msra.mxu0 0.0
    %137 = vmatprep.subr.mxu0 0.0
    %138 = vmatpush1.msra.mxu0 0.0
    %139 = vmatprep.subr.mxu0 0.0
    %140 = vmatpush1.msra.mxu0 0.0
    %141 = vmatprep.subr.mxu0 0.0
    %142 = vmatpush1.msra.mxu0 0.0
    %143 = vmatprep.subr.mxu0 0.0
    %144 = vmatpush1.msra.mxu0 0.0
    %145 = vmatprep.subr.mxu0 0.0
    %146 = vmatpush1.msra.mxu0 0.0
    %147 = vmatprep.subr.mxu0 0.0
    %148 = vmatpush1.msra.mxu0 0.0
    %149 = vmatprep.subr.mxu0 0.0
    %150 = vmatpush1.msra.mxu0 0.0
    %151 = vmatprep.subr.mxu0 0.0
    %152 = vmatpush1.msra.mxu0 0.0
    %153 = vmatprep.subr.mxu0 0.0
    %154 = vmatpush1.msra.mxu0 0.0
    %155 = vmatprep.subr.mxu0 0.0
    %156 = vmatpush1.msra.mxu0 0.0
    %157 = vmatprep.subr.mxu0 0.0
    %158 = vmatpush1.msra.mxu0 0.0
    %159 = vmatprep.subr.mxu0 0.0
    %160 = vmatpush1.msra.mxu0 0.0
    %161 = vmatprep.subr.mxu0 0.0
    %162 = vmatpush1.msra.mxu0 0.0
    %163 = vmatprep.subr.mxu0 0.0
    %164 = vmatpush1.msra.mxu0 0.0
    %165 = vmatprep.subr.mxu0 0.0
    %166 = vmatpush1.msra.mxu0 0.0
    %167 = vmatprep.subr.mxu0 0.0
    %168 = vmatpush1.msra.mxu0 0.0
    %169 = vmatprep.subr.mxu0 0.0
    %170 = vmatpush1.msra.mxu0 0.0
    %171 = vmatprep.subr.mxu0 0.0
    %172 = vmatpush1.msra.mxu0 0.0
    %173 = vmatprep.subr.mxu0 0.0
    %174 = vmatpush1.msra.mxu0 0.0
    %175 = vmatprep.subr.mxu0 0.0
    %176 = vmatpush1.msra.mxu0 0.0
    %177 = vmatprep.mubr.f32.mxu0 0.0
    %178 = vmatmul.mubr.f32.gmra.mrb[0].mxu0 %v111
    %v179 = vpop.f32.mrb[0].mxu0
    %v180 = vadd.f32 0.0, %v179
    %v181 = vpop.f32.mrb[0].mxu0
    %182 = vdwg.mxu0
    %v184 = vlaneseq
    %v185 = vshrl.u32 %v184, 7
    %v186 = vsub.s32 0, %v185
    %v187 = vrot.slane %v105, %v186
    %v189 = vadd.f32 %v187, %v180
    %v190 = vld [vmem:[#allocation5] sm:$0xf]
    %v191 = vld [vmem:[#allocation7 + $0x10] sm:$0xff]
    %v192 = vld [vmem:[#allocation7 + $0x18] sm:$0xff]
    %v193 = vld [vmem:[#allocation7 + $0x20] sm:$0xff]
    %vm194 = vcmask 195584
    %v196 = vsel %vm194, %v190, 0
    %198 = vmatprep.subr.mxu0 0.0
    %199 = vmatpush1.msra.mxu0 %v191
    %200 = vmatprep.subr.mxu0 0.0
    %201 = vmatpush1.msra.mxu0 %v192
    %202 = vmatprep.subr.mxu0 0.0
    %203 = vmatpush1.msra.mxu0 %v193
    %204 = vmatprep.subr.mxu0 0.0
    %205 = vmatpush1.msra.mxu0 0.0
    %206 = vmatprep.subr.mxu0 0.0
    %207 = vmatpush1.msra.mxu0 0.0
    %208 = vmatprep.subr.mxu0 0.0
    %209 = vmatpush1.msra.mxu0 0.0
    %210 = vmatprep.subr.mxu0 0.0
    %211 = vmatpush1.msra.mxu0 0.0
    %212 = vmatprep.subr.mxu0 0.0
    %213 = vmatpush1.msra.mxu0 0.0
    %214 = vmatprep.subr.mxu0 0.0
    %215 = vmatpush1.msra.mxu0 0.0
    %216 = vmatprep.subr.mxu0 0.0
    %217 = vmatpush1.msra.mxu0 0.0
    %218 = vmatprep.subr.mxu0 0.0
    %219 = vmatpush1.msra.mxu0 0.0
    %220 = vmatprep.subr.mxu0 0.0
    %221 = vmatpush1.msra.mxu0 0.0
    %222 = vmatprep.subr.mxu0 0.0
    %223 = vmatpush1.msra.mxu0 0.0
    %224 = vmatprep.subr.mxu0 0.0
    %225 = vmatpush1.msra.mxu0 0.0
    %226 = vmatprep.subr.mxu0 0.0
    %227 = vmatpush1.msra.mxu0 0.0
    %228 = vmatprep.subr.mxu0 0.0
    %229 = vmatpush1.msra.mxu0 0.0
    %230 = vmatprep.subr.mxu0 0.0
    %231 = vmatpush1.msra.mxu0 0.0
    %232 = vmatprep.subr.mxu0 0.0
    %233 = vmatpush1.msra.mxu0 0.0
    %234 = vmatprep.subr.mxu0 0.0
    %235 = vmatpush1.msra.mxu0 0.0
    %236 = vmatprep.subr.mxu0 0.0
    %237 = vmatpush1.msra.mxu0 0.0
    %238 = vmatprep.subr.mxu0 0.0
    %239 = vmatpush1.msra.mxu0 0.0
    %240 = vmatprep.subr.mxu0 0.0
    %241 = vmatpush1.msra.mxu0 0.0
    %242 = vmatprep.subr.mxu0 0.0
    %243 = vmatpush1.msra.mxu0 0.0
    %244 = vmatprep.subr.mxu0 0.0
    %245 = vmatpush1.msra.mxu0 0.0
    %246 = vmatprep.subr.mxu0 0.0
    %247 = vmatpush1.msra.mxu0 0.0
    %248 = vmatprep.subr.mxu0 0.0
    %249 = vmatpush1.msra.mxu0 0.0
    %250 = vmatprep.subr.mxu0 0.0
    %251 = vmatpush1.msra.mxu0 0.0
    %252 = vmatprep.subr.mxu0 0.0
    %253 = vmatpush1.msra.mxu0 0.0
    %254 = vmatprep.subr.mxu0 0.0
    %255 = vmatpush1.msra.mxu0 0.0
    %256 = vmatprep.subr.mxu0 0.0
    %257 = vmatpush1.msra.mxu0 0.0
    %258 = vmatprep.subr.mxu0 0.0
    %259 = vmatpush1.msra.mxu0 0.0
    %260 = vmatprep.subr.mxu0 0.0
    %261 = vmatpush1.msra.mxu0 0.0
    %262 = vmatprep.mubr.f32.mxu0 0.0
    %263 = vmatmul.mubr.f32.gmra.mrb[0].mxu0 %v196
    %v264 = vpop.f32.mrb[0].mxu0
    %v265 = vadd.f32 0.0, %v264
    %v266 = vpop.f32.mrb[0].mxu0
    %267 = vdwg.mxu0
    %v268 = vadd.f32 %v189, %v265
    %v269 = vmul.f32 %v268, 0.5
    %v270 = vmul.f32 %v268, 0.70710677
    %v271 = verf.f32.pop %v270
    %v272 = vadd.f32 %v271, 1.0
    %v273 = vmul.f32 %v269, %v272
    %v274 = vld [vmem:[#allocation8] sm:$0xff]
    %v275 = vld [vmem:[#allocation8 + $0x8] sm:$0xff]
    %v276 = vld [vmem:[#allocation8 + $0x10] sm:$0xff]
    %v277 = vld [vmem:[#allocation8 + $0x18] sm:$0xff]
    %s278 = scalar_lea.vmem %s3, 1
    %v279 = vld [vmem:[%s278] sm:$0x1]
    %v281 = vlaneseq
    %v282 = vshrl.u32 %v281, 7
    %v283 = vsub.s32 0, %v282
    %v284 = vrot.slane %v279, %v283
    %vm286 = vcmask 261120
    %v288 = vsel %vm286, %v273, 0
    %290 = vmatprep.subr.mxu0 0.0
    %291 = vmatpush1.msra.mxu0 %v274
    %292 = vmatprep.subr.mxu0 0.0
    %293 = vmatpush1.msra.mxu0 %v275
    %294 = vmatprep.subr.mxu0 0.0
    %295 = vmatpush1.msra.mxu0 %v276
    %296 = vmatprep.subr.mxu0 0.0
    %297 = vmatpush1.msra.mxu0 %v277
    %298 = vmatprep.subr.mxu0 0.0
    %299 = vmatpush1.msra.mxu0 0.0
    %300 = vmatprep.subr.mxu0 0.0
    %301 = vmatpush1.msra.mxu0 0.0
    %302 = vmatprep.subr.mxu0 0.0
    %303 = vmatpush1.msra.mxu0 0.0
    %304 = vmatprep.subr.mxu0 0.0
    %305 = vmatpush1.msra.mxu0 0.0
    %306 = vmatprep.subr.mxu0 0.0
    %307 = vmatpush1.msra.mxu0 0.0
    %308 = vmatprep.subr.mxu0 0.0
    %309 = vmatpush1.msra.mxu0 0.0
    %310 = vmatprep.subr.mxu0 0.0
    %311 = vmatpush1.msra.mxu0 0.0
    %312 = vmatprep.subr.mxu0 0.0
    %313 = vmatpush1.msra.mxu0 0.0
    %314 = vmatprep.subr.mxu0 0.0
    %315 = vmatpush1.msra.mxu0 0.0
    %316 = vmatprep.subr.mxu0 0.0
    %317 = vmatpush1.msra.mxu0 0.0
    %318 = vmatprep.subr.mxu0 0.0
    %319 = vmatpush1.msra.mxu0 0.0
    %320 = vmatprep.subr.mxu0 0.0
    %321 = vmatpush1.msra.mxu0 0.0
    %322 = vmatprep.subr.mxu0 0.0
    %323 = vmatpush1.msra.mxu0 0.0
    %324 = vmatprep.subr.mxu0 0.0
    %325 = vmatpush1.msra.mxu0 0.0
    %326 = vmatprep.subr.mxu0 0.0
    %327 = vmatpush1.msra.mxu0 0.0
    %328 = vmatprep.subr.mxu0 0.0
    %329 = vmatpush1.msra.mxu0 0.0
    %330 = vmatprep.subr.mxu0 0.0
    %331 = vmatpush1.msra.mxu0 0.0
    %332 = vmatprep.subr.mxu0 0.0
    %333 = vmatpush1.msra.mxu0 0.0
    %334 = vmatprep.subr.mxu0 0.0
    %335 = vmatpush1.msra.mxu0 0.0
    %336 = vmatprep.subr.mxu0 0.0
    %337 = vmatpush1.msra.mxu0 0.0
    %338 = vmatprep.subr.mxu0 0.0
    %339 = vmatpush1.msra.mxu0 0.0
    %340 = vmatprep.subr.mxu0 0.0
    %341 = vmatpush1.msra.mxu0 0.0
    %342 = vmatprep.subr.mxu0 0.0
    %343 = vmatpush1.msra.mxu0 0.0
    %344 = vmatprep.subr.mxu0 0.0
    %345 = vmatpush1.msra.mxu0 0.0
    %346 = vmatprep.subr.mxu0 0.0
    %347 = vmatpush1.msra.mxu0 0.0
    %348 = vmatprep.subr.mxu0 0.0
    %349 = vmatpush1.msra.mxu0 0.0
    %350 = vmatprep.subr.mxu0 0.0
    %351 = vmatpush1.msra.mxu0 0.0
    %352 = vmatprep.subr.mxu0 0.0
    %353 = vmatpush1.msra.mxu0 0.0
    %354 = vmatprep.mubr.f32.mxu0 0.0
    %355 = vmatmul.mubr.f32.gmra.mrb[0].mxu0 %v288
    %v356 = vpop.f32.mrb[0].mxu0
    %v357 = vadd.f32 %v284, %v356
    %v358 = vpop.f32.mrb[0].mxu0
    %359 = vdwg.mxu0
    %v360 = vmul.f32 %v357, 0.5
    %v361 = vmul.f32 %v357, 0.70710677
    %v362 = verf.f32.pop %v361
    %v363 = vadd.f32 %v362, 1.0
    %v364 = vmul.f32 %v360, %v363
    %v365 = vld [vmem:[#allocation10] sm:$0xff]
    %v366 = vld [vmem:[#allocation10 + $0x8] sm:$0xff]
    %v367 = vld [vmem:[#allocation10 + $0x10] sm:$0xff]
    %v368 = vld [vmem:[#allocation10 + $0x18] sm:$0xff]
    %s369 = scalar_lea.vmem %s3, 2
    %v370 = vld [vmem:[%s369] sm:$0x1]
    %v372 = vlaneseq
    %v373 = vshrl.u32 %v372, 7
    %v374 = vsub.s32 0, %v373
    %v375 = vrot.slane %v370, %v374
    %v378 = vsel %vm286, %v364, 0
    %380 = vmatprep.subr.mxu0 0.0
    %381 = vmatpush1.msra.mxu0 %v365
    %382 = vmatprep.subr.mxu0 0.0
    %383 = vmatpush1.msra.mxu0 %v366
    %384 = vmatprep.subr.mxu0 0.0
    %385 = vmatpush1.msra.mxu0 %v367
    %386 = vmatprep.subr.mxu0 0.0
    %387 = vmatpush1.msra.mxu0 %v368
    %388 = vmatprep.subr.mxu0 0.0
    %389 = vmatpush1.msra.mxu0 0.0
    %390 = vmatprep.subr.mxu0 0.0
    %391 = vmatpush1.msra.mxu0 0.0
    %392 = vmatprep.subr.mxu0 0.0
    %393 = vmatpush1.msra.mxu0 0.0
    %394 = vmatprep.subr.mxu0 0.0
    %395 = vmatpush1.msra.mxu0 0.0
    %396 = vmatprep.subr.mxu0 0.0
    %397 = vmatpush1.msra.mxu0 0.0
    %398 = vmatprep.subr.mxu0 0.0
    %399 = vmatpush1.msra.mxu0 0.0
    %400 = vmatprep.subr.mxu0 0.0
    %401 = vmatpush1.msra.mxu0 0.0
    %402 = vmatprep.subr.mxu0 0.0
    %403 = vmatpush1.msra.mxu0 0.0
    %404 = vmatprep.subr.mxu0 0.0
    %405 = vmatpush1.msra.mxu0 0.0
    %406 = vmatprep.subr.mxu0 0.0
    %407 = vmatpush1.msra.mxu0 0.0
    %408 = vmatprep.subr.mxu0 0.0
    %409 = vmatpush1.msra.mxu0 0.0
    %410 = vmatprep.subr.mxu0 0.0
    %411 = vmatpush1.msra.mxu0 0.0
    %412 = vmatprep.subr.mxu0 0.0
    %413 = vmatpush1.msra.mxu0 0.0
    %414 = vmatprep.subr.mxu0 0.0
    %415 = vmatpush1.msra.mxu0 0.0
    %416 = vmatprep.subr.mxu0 0.0
    %417 = vmatpush1.msra.mxu0 0.0
    %418 = vmatprep.subr.mxu0 0.0
    %419 = vmatpush1.msra.mxu0 0.0
    %420 = vmatprep.subr.mxu0 0.0
    %421 = vmatpush1.msra.mxu0 0.0
    %422 = vmatprep.subr.mxu0 0.0
    %423 = vmatpush1.msra.mxu0 0.0
    %424 = vmatprep.subr.mxu0 0.0
    %425 = vmatpush1.msra.mxu0 0.0
    %426 = vmatprep.subr.mxu0 0.0
    %427 = vmatpush1.msra.mxu0 0.0
    %428 = vmatprep.subr.mxu0 0.0
    %429 = vmatpush1.msra.mxu0 0.0
    %430 = vmatprep.subr.mxu0 0.0
    %431 = vmatpush1.msra.mxu0 0.0
    %432 = vmatprep.subr.mxu0 0.0
    %433 = vmatpush1.msra.mxu0 0.0
    %434 = vmatprep.subr.mxu0 0.0
    %435 = vmatpush1.msra.mxu0 0.0
    %436 = vmatprep.subr.mxu0 0.0
    %437 = vmatpush1.msra.mxu0 0.0
    %438 = vmatprep.subr.mxu0 0.0
    %439 = vmatpush1.msra.mxu0 0.0
    %440 = vmatprep.subr.mxu0 0.0
    %441 = vmatpush1.msra.mxu0 0.0
    %442 = vmatprep.subr.mxu0 0.0
    %443 = vmatpush1.msra.mxu0 0.0
    %444 = vmatprep.mubr.f32.mxu0 0.0
    %445 = vmatmul.mubr.f32.gmra.mrb[0].mxu0 %v378
    %v446 = vpop.f32.mrb[0].mxu0
    %v447 = vadd.f32 %v375, %v446
    %v448 = vpop.f32.mrb[0].mxu0
    %449 = vdwg.mxu0
    %v450 = vmul.f32 %v447, 0.5
    %v451 = vmul.f32 %v447, 0.70710677
    %v452 = verf.f32.pop %v451
    %v453 = vadd.f32 %v452, 1.0
    %v454 = vmul.f32 %v450, %v453
    %v455 = vld [vmem:[#allocation11] sm:$0xff]
    %v456 = vld [vmem:[#allocation11 + $0x8] sm:$0xff]
    %v457 = vld [vmem:[#allocation11 + $0x10] sm:$0xff]
    %v458 = vld [vmem:[#allocation11 + $0x18] sm:$0xff]
    %s459 = scalar_lea.vmem %s3, 3
    %v460 = vld [vmem:[%s459] sm:$0x1]
    %v462 = vlaneseq
    %v463 = vshrl.u32 %v462, 7
    %v464 = vsub.s32 0, %v463
    %v465 = vrot.slane %v460, %v464
    %v468 = vsel %vm286, %v454, 0
    %470 = vmatprep.subr.mxu0 0.0
    %471 = vmatpush1.msra.mxu0 %v455
    %472 = vmatprep.subr.mxu0 0.0
    %473 = vmatpush1.msra.mxu0 %v456
    %474 = vmatprep.subr.mxu0 0.0
    %475 = vmatpush1.msra.mxu0 %v457
    %476 = vmatprep.subr.mxu0 0.0
    %477 = vmatpush1.msra.mxu0 %v458
    %478 = vmatprep.subr.mxu0 0.0
    %479 = vmatpush1.msra.mxu0 0.0
    %480 = vmatprep.subr.mxu0 0.0
    %481 = vmatpush1.msra.mxu0 0.0
    %482 = vmatprep.subr.mxu0 0.0
    %483 = vmatpush1.msra.mxu0 0.0
    %484 = vmatprep.subr.mxu0 0.0
    %485 = vmatpush1.msra.mxu0 0.0
    %486 = vmatprep.subr.mxu0 0.0
    %487 = vmatpush1.msra.mxu0 0.0
    %488 = vmatprep.subr.mxu0 0.0
    %489 = vmatpush1.msra.mxu0 0.0
    %490 = vmatprep.subr.mxu0 0.0
    %491 = vmatpush1.msra.mxu0 0.0
    %492 = vmatprep.subr.mxu0 0.0
    %493 = vmatpush1.msra.mxu0 0.0
    %494 = vmatprep.subr.mxu0 0.0
    %495 = vmatpush1.msra.mxu0 0.0
    %496 = vmatprep.subr.mxu0 0.0
    %497 = vmatpush1.msra.mxu0 0.0
    %498 = vmatprep.subr.mxu0 0.0
    %499 = vmatpush1.msra.mxu0 0.0
    %500 = vmatprep.subr.mxu0 0.0
    %501 = vmatpush1.msra.mxu0 0.0
    %502 = vmatprep.subr.mxu0 0.0
    %503 = vmatpush1.msra.mxu0 0.0
    %504 = vmatprep.subr.mxu0 0.0
    %505 = vmatpush1.msra.mxu0 0.0
    %506 = vmatprep.subr.mxu0 0.0
    %507 = vmatpush1.msra.mxu0 0.0
    %508 = vmatprep.subr.mxu0 0.0
    %509 = vmatpush1.msra.mxu0 0.0
    %510 = vmatprep.subr.mxu0 0.0
    %511 = vmatpush1.msra.mxu0 0.0
    %512 = vmatprep.subr.mxu0 0.0
    %513 = vmatpush1.msra.mxu0 0.0
    %514 = vmatprep.subr.mxu0 0.0
    %515 = vmatpush1.msra.mxu0 0.0
    %516 = vmatprep.subr.mxu0 0.0
    %517 = vmatpush1.msra.mxu0 0.0
    %518 = vmatprep.subr.mxu0 0.0
    %519 = vmatpush1.msra.mxu0 0.0
    %520 = vmatprep.subr.mxu0 0.0
    %521 = vmatpush1.msra.mxu0 0.0
    %522 = vmatprep.subr.mxu0 0.0
    %523 = vmatpush1.msra.mxu0 0.0
    %524 = vmatprep.subr.mxu0 0.0
    %525 = vmatpush1.msra.mxu0 0.0
    %526 = vmatprep.subr.mxu0 0.0
    %527 = vmatpush1.msra.mxu0 0.0
    %528 = vmatprep.subr.mxu0 0.0
    %529 = vmatpush1.msra.mxu0 0.0
    %530 = vmatprep.subr.mxu0 0.0
    %531 = vmatpush1.msra.mxu0 0.0
    %532 = vmatprep.subr.mxu0 0.0
    %533 = vmatpush1.msra.mxu0 0.0
    %534 = vmatprep.mubr.f32.mxu0 0.0
    %535 = vmatmul.mubr.f32.gmra.mrb[0].mxu0 %v468
    %v536 = vpop.f32.mrb[0].mxu0
    %v537 = vadd.f32 %v465, %v536
    %v538 = vpop.f32.mrb[0].mxu0
    %539 = vdwg.mxu0
    %vm540 = vcmask 125952
    %541 = vst.msk [vmem:[#allocation13] sm:$0xf] %vm540, %v537
    // Predicated region
    $region54: #{tpu_custom_call.1} parent=1 // pred_check
      _
    $region55: #{tpu_custom_call.1} parent=1 // pred_check_branch
      %543 = sbr.rel (0) target = $region57
    $region56: #{tpu_custom_call.1} parent=1 // pred_region
      %s545 = ssub.s32 64, 64
      %546 = vsyncadd [#allocation4], %s545
      %s548 = sshll.u32 [#allocation13], 4
      %s549 = int_to_ptr.vmem [resolvable:$true] %s548
      %551 = dma.vmem_to_hbm [thread:$0]  %s549, 64, %s7, [#allocation4]
    $region57: #{tpu_custom_call.1} parent=1 // pred_fallthru
      _
    // Predicated region
    $region58: #{tpu_custom_call.1} parent=1 // pred_check
      _
    $region59: #{tpu_custom_call.1} parent=1 // pred_check_branch
      %553 = sbr.rel (0) target = $region61
    $region60: #{tpu_custom_call.1} parent=1 // pred_region
      %554 = dma.done [#allocation4], 64
    $region61: #{tpu_custom_call.1} parent=1 // pred_fallthru
      _
    %555 = vsyncpa [#allocation3], 1
    %556 = vsyncpa [#allocation6], 1
    %557 = vsyncpa [#allocation9], 1
    %558 = vsyncpa [#allocation12], 1
    %559 = vsyncpa [#allocation4], 1

</llo_original>
